<compile_context>
chip_gen: v6e
topology: v6e:2x2x1
jax: 0.10.0
libtpu: 0.0.40
codegen_flags: <defaults>
</compile_context>

<pallas_src>
import functools

import jax
import jax.numpy as jnp
import numpy as np
from jax import lax
from jax.experimental import pallas as pl
from jax.experimental.pallas import tpu as pltpu


# The 8 off-center taps of a 3x3 kernel (center (1,1) is handled separately).
_OFF_TAPS = tuple((kh, kw) for kh in range(3) for kw in range(3)
                  if not (kh == 1 and kw == 1))


def _aspp_kernel(x_ref, w_off_ref, w_ctr_ref, b_ref, out_ref, y_ref, *,
                 K, Wp, HWo, dil_pad, max_pad):
    # x_ref    : (1, TC, Hp*Wp)  channel chunk of the zero-padded NCHW-flat input
    # w_off_ref: (B, 8*K, TC)    off-center tap weights, tap-major rows, TC lanes
    # w_ctr_ref: (K, TC)         center-tap weights, pre-summed over branches
    # b_ref    : (K, 1)          biases, pre-summed over branches
    # out_ref  : (1, K, HWo)     f32 output block; doubles as the accumulator
    # y_ref    : (8*K, Hp*Wp)    f32 merged-tap matmul result (per branch)
    c = pl.program_id(1)

    @pl.when(c == 0)
    def _init():
        out_ref[...] = jnp.zeros(out_ref.shape, out_ref.dtype)

    x = x_ref[0]                                    # (TC, Hp*Wp), contiguous MXU operand

    def add_shifted(row_lo, oh, ow):
        # Flat-shift: output q = h*Wp + w reads padded position q + oh*Wp + ow.
        sh = oh * Wp + ow
        out_ref[0] += y_ref[row_lo:row_lo + K, sh:sh + HWo]

    # Deduped center tap: offset == (max_pad, max_pad) for every branch since
    # padding == dilation; weights were pre-summed over branches.
    y_ref[0:K, :] = jnp.dot(w_ctr_ref[...], x, preferred_element_type=jnp.float32)
    add_shifted(0, max_pad, max_pad)

    # One merged (8*K, TC) @ (TC, Hp*Wp) MXU pass per branch, then 8 cheap
    # lane-shifted (K, HWo) adds into the lane-dense accumulator.
    for b, (d, p) in enumerate(dil_pad):
        y_ref[...] = jnp.dot(w_off_ref[b], x, preferred_element_type=jnp.float32)
        for t, (kh, kw) in enumerate(_OFF_TAPS):
            add_shifted(t * K, max_pad - p + kh * d, max_pad - p + kw * d)

    @pl.when(c == pl.num_programs(1) - 1)
    def _finalize():
        out_ref[0] += b_ref[...]                    # (K, 1) broadcast over lanes


def _vmem_capacity_bytes():
    try:
        info = pltpu.get_tpu_info()
        cap = getattr(info, "vmem_capacity_bytes", None)
        if cap:
            return int(cap)
    except Exception:
        pass
    return 64 * 1024 * 1024      # conservative (v7x-sized) fallback


def aspp_classifier_pallas(x_nchw, weights_oihw, biases, dilations, paddings,
                           *, compute_dtype=None, channel_chunk=None):
    """Forward pass of ASPP_Classifier (no resize).

    x_nchw       : (N, C, H, W) float32
    weights_oihw : list of (K, C, 3, 3) float32, one per branch
    biases       : list of (K,)          float32, one per branch
    compute_dtype: None -> bfloat16 (recommended on v5e/v6e/v7x; accumulation is
                   always f32).  Pass jnp.float32 for strict f32 parity.
    channel_chunk: optional explicit reduction-tile override (multiple of 128,
                   or >= C for a single chunk); None -> auto from VMEM budget.
    """
    assert len(weights_oihw) == len(biases) == len(dilations) == len(paddings)
    # Typical ASPP usage: padding_series == dilation_series (output is "same").
    assert all(p == d for p, d in zip(paddings, dilations)), \
        "ASPP_Classifier requires padding == dilation for branch outputs to match"

    if compute_dtype is None:
        compute_dtype = jnp.bfloat16
    compute_dtype = jnp.dtype(compute_dtype)
    in_item = compute_dtype.itemsize

    N, C, H, W = x_nchw.shape
    K = weights_oihw[0].shape[0]
    B = len(weights_oihw)
    max_pad = max(paddings)
    Hp, Wp = H + 2 * max_pad, W + 2 * max_pad
    HWp = Hp * Wp
    HWo = (H - 1) * Wp + W        # flat output extent (last row stops at W)

    # ---- generation-aware scoped-VMEM limit --------------------------------
    vmem_cap = _vmem_capacity_bytes()
    vmem_limit = max(32 * 1024 * 1024,
                     min(vmem_cap - 8 * 1024 * 1024, 110 * 1024 * 1024))

    # ---- reduction-tile (TC) selection: prefer multiples of 256 -------------
    def footprint(tc):
        return (2 * tc * HWp * in_item              # x block (double-buffered)
                + 2 * (8 * B * K + K) * tc * in_item  # weights (double-buffered)
                + 2 * K * HWo * 4                   # resident f32 output block
                + 8 * K * HWp * 4                   # merged-tap f32 scratch
                + 2 * 1024 * 1024)                  # compiler-temporary slack

    if channel_chunk is not None:
        TC = int(channel_chunk)
        if TC >= C:
            TC = C
        elif TC % 128 != 0:
            raise ValueError("channel_chunk must be a multiple of 128 or >= C")
    else:
        budget = int(0.8 * vmem_limit)
        TC = C if footprint(C) <= budget else None
        if TC is None:
            for t in (2048, 1024, 512, 256, 128):   # 256-multiples first (MXU depth)
                if t < C and footprint(t) <= budget:
                    TC = t
                    break
        if TC is None:
            TC = 128   # TODO(synk): spatial strip tiling for huge Hp*Wp / tiny VMEM
    n_c = -(-C // TC)
    C_pad = n_c * TC               # zero-padded channels contribute exactly 0

    # ---- glue: NCHW kept as-is; pad spatial halo + channels, flatten spatial --
    x = x_nchw.astype(compute_dtype)
    x_pad = jnp.pad(x, ((0, 0), (0, C_pad - C),
                        (max_pad, max_pad), (max_pad, max_pad)))
    x_flat = x_pad.reshape(N, C_pad, HWp)           # channels->sublanes, spatial->lanes

    # Weights: tap-major rows, channels last (lane-dense DMA).
    w32 = [w.astype(jnp.float32) for w in weights_oihw]
    w_ctr = functools.reduce(lambda a, b: a + b, [w[:, :, 1, 1] for w in w32])  # (K, C)
    w_ctr = jnp.pad(w_ctr, ((0, 0), (0, C_pad - C))).astype(compute_dtype)
    w_off = jnp.stack(
        [jnp.concatenate([w[:, :, kh, kw] for (kh, kw) in _OFF_TAPS], axis=0)
         for w in w32], axis=0)                      # (B, 8*K, C)
    w_off = jnp.pad(w_off, ((0, 0), (0, 0), (0, C_pad - C))).astype(compute_dtype)
    # Folded bias: one (K, 1) f32 vector added once at finalize.
    b_sum = functools.reduce(lambda a, b: a + b,
                             [b.astype(jnp.float32) for b in biases]).reshape(K, 1)

    kernel = functools.partial(
        _aspp_kernel, K=K, Wp=Wp, HWo=HWo,
        dil_pad=tuple(zip(dilations, paddings)), max_pad=max_pad)

    out_flat = pl.pallas_call(
        kernel,
        out_shape=jax.ShapeDtypeStruct((N, K, HWo), jnp.float32),
        grid_spec=pltpu.PrefetchScalarGridSpec(
            num_scalar_prefetch=0,
            grid=(N, n_c),                            # reduction (C) axis last
            in_specs=[
                pl.BlockSpec((1, TC, HWp), lambda n, c: (n, c, 0)),
                pl.BlockSpec((B, 8 * K, TC), lambda n, c: (0, 0, c)),
                pl.BlockSpec((K, TC), lambda n, c: (0, c)),
                pl.BlockSpec((K, 1), lambda n, c: (0, 0)),
            ],
            out_specs=pl.BlockSpec((1, K, HWo), lambda n, c: (n, 0, 0)),
            scratch_shapes=[pltpu.VMEM((8 * K, HWp), jnp.float32)],
        ),
        compiler_params=pltpu.CompilerParams(
            dimension_semantics=("parallel", "arbitrary"),
            vmem_limit_bytes=int(vmem_limit),
        ),
    )(x_flat, w_off, w_ctr, b_sum)

    # (N, K, (H-1)*Wp + W) -> (N, K, H, W): pad the tiny K-channel output to a
    # full row multiple (free-ish), reshape (bitcast), slice the W valid columns.
    out_rows = jnp.pad(out_flat, ((0, 0), (0, 0), (0, Wp - W)))
    return out_rows.reshape(N, K, H, Wp)[:, :, :, :W]


def bilinear_resize_align_corners(x_nchw, size):
    """F.interpolate(mode='bilinear', align_corners=True) equivalent (plain JAX glue)."""
    N, C, H, W = x_nchw.shape
    Ho, Wo = size
    ys = jnp.linspace(0.0, H - 1.0, Ho) if Ho > 1 else jnp.zeros((Ho,))
    xs = jnp.linspace(0.0, W - 1.0, Wo) if Wo > 1 else jnp.zeros((Wo,))
    y0 = jnp.clip(jnp.floor(ys).astype(jnp.int32), 0, H - 1)
    x0 = jnp.clip(jnp.floor(xs).astype(jnp.int32), 0, W - 1)
    y1 = jnp.clip(y0 + 1, 0, H - 1)
    x1 = jnp.clip(x0 + 1, 0, W - 1)
    wy = (ys - y0.astype(jnp.float32))[:, None]
    wx = (xs - x0.astype(jnp.float32))[None, :]
    g = lambda yi, xi: x_nchw[:, :, yi, :][:, :, :, xi]
    top = g(y0, x0) * (1 - wx) + g(y0, x1) * wx
    bot = g(y1, x0) * (1 - wx) + g(y1, x1) * wx
    return top * (1 - wy) + bot * wy


def aspp_classifier_forward(x_nchw, weights, biases, dilations, paddings,
                            size=None, **kw):
    out = aspp_classifier_pallas(x_nchw, weights, biases, dilations, paddings, **kw)
    if size is not None:
        out = bilinear_resize_align_corners(out, size)
    return out


def _reference_forward(x, weights, biases, dilations, paddings):
    out = None
    for w, b, d, p in zip(weights, biases, dilations, paddings):
        y = lax.conv_general_dilated(
            x, w, window_strides=(1, 1), padding=[(p, p), (p, p)],
            rhs_dilation=(d, d),
            dimension_numbers=("NCHW", "OIHW", "NCHW"),
        ) + b[None, :, None, None]
        out = y if out is None else out + y
    return out


def _make_params(key, cin, num_classes, n_branches):
    ks = jax.random.split(key, 2 * n_branches)
    weights, biases = [], []
    bound = 1.0 / np.sqrt(cin * 3 * 3)
    for i in range(n_branches):
        w = 0.01 * jax.random.normal(ks[2 * i], (num_classes, cin, 3, 3),
                                     dtype=jnp.float32)
        b = jax.random.uniform(ks[2 * i + 1], (num_classes,),
                               minval=-bound, maxval=bound, dtype=jnp.float32)
        weights.append(w)
        biases.append(b)
    return weights, biases


if __name__ == "__main__":
    key = jax.random.PRNGKey(0)
    k1, k2, k3, k4 = jax.random.split(key, 4)
    num_classes = 5

    # ---- check 1: strict f32 path, single channel chunk --------------------
    N, Cin, H, W = 2, 4, 16, 16
    dils, pads = [1, 2, 3], [1, 2, 3]
    x = jax.random.normal(k1, (N, Cin, H, W), dtype=jnp.float32)
    weights, biases = _make_params(k2, Cin, num_classes, len(dils))
    out = jax.block_until_ready(
        aspp_classifier_forward(x, weights, biases, dils, pads,
                                compute_dtype=jnp.float32))
    ref = jax.block_until_ready(
        _reference_forward(x, weights, biases, dils, pads))
    np.testing.assert_allclose(np.asarray(out), np.asarray(ref),
                               rtol=2e-4, atol=2e-5)
    assert out.shape == (N, num_classes, H, W)

    # ---- check 2: channel-chunked reduction path (C > TC), f32 -------------
    N2, Cin2, H2, W2 = 1, 256, 8, 8
    dil2, pad2 = [1, 2], [1, 2]
    x2 = jax.random.normal(k3, (N2, Cin2, H2, W2), dtype=jnp.float32)
    weights2, biases2 = _make_params(k4, Cin2, num_classes, len(dil2))
    out2 = jax.block_until_ready(
        aspp_classifier_forward(x2, weights2, biases2, dil2, pad2,
                                compute_dtype=jnp.float32, channel_chunk=128))
    ref2 = jax.block_until_ready(
        _reference_forward(x2, weights2, biases2, dil2, pad2))
    np.testing.assert_allclose(np.asarray(out2), np.asarray(ref2),
                               rtol=1e-4, atol=1e-4)
    assert out2.shape == (N2, num_classes, H2, W2)

    # ---- check 3: default bf16 MXU path (f32 accumulation), loose tolerance -
    out3 = jax.block_until_ready(
        aspp_classifier_forward(x2, weights2, biases2, dil2, pad2))
    np.testing.assert_allclose(np.asarray(out3), np.asarray(ref2),
                               rtol=5e-2, atol=2e-2)

    print("KERNEL_OK")
</pallas_src>

<mosaic_0001>
module attributes {stable_mosaic.version = 11 : i64} {
  func.func @_aspp_kernel(%arg0: i32, %arg1: i32, %arg2: memref<1x4x484xf32, #tpu.memory_space<vmem>>, %arg3: memref<3x40x4xf32, #tpu.memory_space<vmem>>, %arg4: memref<5x4xf32, #tpu.memory_space<vmem>>, %arg5: memref<5x1xf32, #tpu.memory_space<vmem>>, %arg6: memref<1x5x346xf32, #tpu.memory_space<vmem>>, %arg7: memref<40x484xf32, #tpu.memory_space<vmem>>) attributes {dimension_semantics = [#tpu.dimension_semantics<parallel>, #tpu.dimension_semantics<arbitrary>], iteration_bounds = array<i64: 2, 1>, scalar_prefetch = 0 : i64, scratch_operands = 1 : i64, tpu.core_type = #tpu.core_type<tc>, window_params = [{transform_indices = @transform_0, window_bounds = array<i64: 1, 4, 484>}, {transform_indices = @transform_1, window_bounds = array<i64: 3, 40, 4>}, {transform_indices = @transform_2, window_bounds = array<i64: 5, 4>}, {pipeline_mode = #tpu.pipeline_mode<synchronous>, transform_indices = @transform_3, window_bounds = array<i64: 5, 1>}, {transform_indices = @transform_4, window_bounds = array<i64: 1, 5, 346>}]} {
    %c0_i32 = arith.constant 0 : i32
    %0 = arith.cmpi eq, %arg1, %c0_i32 : i32
    %1 = arith.extui %0 : i1 to i32
    %c0_i32_0 = arith.constant 0 : i32
    %2 = arith.cmpi ne, %1, %c0_i32_0 : i32
    scf.if %2 {
      %cst_195 = arith.constant 0.000000e+00 : f32
      %198 = vector.broadcast %cst_195 : f32 to vector<1x5x346xf32>
      %c0_196 = arith.constant 0 : index
      %c0_197 = arith.constant 0 : index
      %c0_198 = arith.constant 0 : index
      %199 = vector.load %arg6[%c0_196, %c0_197, %c0_198] : memref<1x5x346xf32, #tpu.memory_space<vmem>>, vector<1x5x346xf32>
      tpu.vector_store %arg6[%c0_196, %c0_197, %c0_198], %198 {strides = array<i32>} : memref<1x5x346xf32, #tpu.memory_space<vmem>>, vector<1x5x346xf32>,
    } else {
    }
    %c0 = arith.constant 0 : index
    %c0_1 = arith.constant 0 : index
    %c0_2 = arith.constant 0 : index
    %3 = vector.load %arg2[%c0, %c0_1, %c0_2] : memref<1x4x484xf32, #tpu.memory_space<vmem>>, vector<1x4x484xf32>
    %4 = vector.shape_cast %3 : vector<1x4x484xf32> to vector<4x484xf32>
    %c0_3 = arith.constant 0 : index
    %c0_4 = arith.constant 0 : index
    %5 = vector.load %arg4[%c0_3, %c0_4] : memref<5x4xf32, #tpu.memory_space<vmem>>, vector<5x4xf32>
    %cst = arith.constant dense<0.000000e+00> : vector<5x484xf32>
    %6 = tpu.matmul %5, %4, %cst {dimension_numbers = #tpu.dot_dimension_numbers<[1], [0], [0], [1], [0, 0, 1, 1], [], []>} : vector<5x4xf32>, vector<4x484xf32>, vector<5x484xf32> -> vector<5x484xf32>
    %c0_5 = arith.constant 0 : index
    %c0_6 = arith.constant 0 : index
    %7 = vector.load %arg7[%c0_5, %c0_6] : memref<40x484xf32, #tpu.memory_space<vmem>>, vector<5x484xf32>
    tpu.vector_store %arg7[%c0_5, %c0_6], %6 {strides = array<i32>} : memref<40x484xf32, #tpu.memory_space<vmem>>, vector<5x484xf32>,
    %c0_7 = arith.constant 0 : index
    %c0_8 = arith.constant 0 : index
    %c0_9 = arith.constant 0 : index
    %8 = vector.load %arg6[%c0_7, %c0_8, %c0_9] : memref<1x5x346xf32, #tpu.memory_space<vmem>>, vector<1x5x346xf32>
    %9 = vector.shape_cast %8 : vector<1x5x346xf32> to vector<5x346xf32>
    %c0_10 = arith.constant 0 : index
    %c69 = arith.constant 69 : index
    %10 = vector.load %arg7[%c0_10, %c69] : memref<40x484xf32, #tpu.memory_space<vmem>>, vector<5x346xf32>
    %11 = arith.addf %9, %10 : vector<5x346xf32>
    %c0_11 = arith.constant 0 : index
    %c0_12 = arith.constant 0 : index
    %c0_13 = arith.constant 0 : index
    %12 = vector.load %arg6[%c0_11, %c0_12, %c0_13] : memref<1x5x346xf32, #tpu.memory_space<vmem>>, vector<1x5x346xf32>
    %13 = vector.shape_cast %12 : vector<1x5x346xf32> to vector<5x346xf32>
    %14 = vector.shape_cast %11 : vector<5x346xf32> to vector<1x5x346xf32>
    tpu.vector_store %arg6[%c0_11, %c0_12, %c0_13], %14 {strides = array<i32>} : memref<1x5x346xf32, #tpu.memory_space<vmem>>, vector<1x5x346xf32>,
    %c0_14 = arith.constant 0 : index
    %c0_15 = arith.constant 0 : index
    %c0_16 = arith.constant 0 : index
    %15 = vector.load %arg3[%c0_14, %c0_15, %c0_16] : memref<3x40x4xf32, #tpu.memory_space<vmem>>, vector<1x40x4xf32>
    %16 = vector.shape_cast %15 : vector<1x40x4xf32> to vector<40x4xf32>
    %cst_17 = arith.constant dense<0.000000e+00> : vector<40x484xf32>
    %17 = tpu.matmul %16, %4, %cst_17 {dimension_numbers = #tpu.dot_dimension_numbers<[1], [0], [0], [1], [0, 0, 1, 1], [], []>} : vector<40x4xf32>, vector<4x484xf32>, vector<40x484xf32> -> vector<40x484xf32>
    %c0_18 = arith.constant 0 : index
    %c0_19 = arith.constant 0 : index
    %18 = vector.load %arg7[%c0_18, %c0_19] : memref<40x484xf32, #tpu.memory_space<vmem>>, vector<40x484xf32>
    tpu.vector_store %arg7[%c0_18, %c0_19], %17 {strides = array<i32>} : memref<40x484xf32, #tpu.memory_space<vmem>>, vector<40x484xf32>,
    %c0_20 = arith.constant 0 : index
    %c0_21 = arith.constant 0 : index
    %c0_22 = arith.constant 0 : index
    %19 = vector.load %arg6[%c0_20, %c0_21, %c0_22] : memref<1x5x346xf32, #tpu.memory_space<vmem>>, vector<1x5x346xf32>
    %20 = vector.shape_cast %19 : vector<1x5x346xf32> to vector<5x346xf32>
    %c0_23 = arith.constant 0 : index
    %c46 = arith.constant 46 : index
    %21 = vector.load %arg7[%c0_23, %c46] : memref<40x484xf32, #tpu.memory_space<vmem>>, vector<5x346xf32>
    %22 = arith.addf %20, %21 : vector<5x346xf32>
    %c0_24 = arith.constant 0 : index
    %c0_25 = arith.constant 0 : index
    %c0_26 = arith.constant 0 : index
    %23 = vector.load %arg6[%c0_24, %c0_25, %c0_26] : memref<1x5x346xf32, #tpu.memory_space<vmem>>, vector<1x5x346xf32>
    %24 = vector.shape_cast %23 : vector<1x5x346xf32> to vector<5x346xf32>
    %25 = vector.shape_cast %22 : vector<5x346xf32> to vector<1x5x346xf32>
    tpu.vector_store %arg6[%c0_24, %c0_25, %c0_26], %25 {strides = array<i32>} : memref<1x5x346xf32, #tpu.memory_space<vmem>>, vector<1x5x346xf32>,
    %c0_27 = arith.constant 0 : index
    %c0_28 = arith.constant 0 : index
    %c0_29 = arith.constant 0 : index
    %26 = vector.load %arg6[%c0_27, %c0_28, %c0_29] : memref<1x5x346xf32, #tpu.memory_space<vmem>>, vector<1x5x346xf32>
    %27 = vector.shape_cast %26 : vector<1x5x346xf32> to vector<5x346xf32>
    %c5 = arith.constant 5 : index
    %c47 = arith.constant 47 : index
    %28 = vector.load %arg7[%c5, %c47] : memref<40x484xf32, #tpu.memory_space<vmem>>, vector<5x346xf32>
    %29 = arith.addf %27, %28 : vector<5x346xf32>
    %c0_30 = arith.constant 0 : index
    %c0_31 = arith.constant 0 : index
    %c0_32 = arith.constant 0 : index
    %30 = vector.load %arg6[%c0_30, %c0_31, %c0_32] : memref<1x5x346xf32, #tpu.memory_space<vmem>>, vector<1x5x346xf32>
    %31 = vector.shape_cast %30 : vector<1x5x346xf32> to vector<5x346xf32>
    %32 = vector.shape_cast %29 : vector<5x346xf32> to vector<1x5x346xf32>
    tpu.vector_store %arg6[%c0_30, %c0_31, %c0_32], %32 {strides = array<i32>} : memref<1x5x346xf32, #tpu.memory_space<vmem>>, vector<1x5x346xf32>,
    %c0_33 = arith.constant 0 : index
    %c0_34 = arith.constant 0 : index
    %c0_35 = arith.constant 0 : index
    %33 = vector.load %arg6[%c0_33, %c0_34, %c0_35] : memref<1x5x346xf32, #tpu.memory_space<vmem>>, vector<1x5x346xf32>
    %34 = vector.shape_cast %33 : vector<1x5x346xf32> to vector<5x346xf32>
    %c10 = arith.constant 10 : index
    %c48 = arith.constant 48 : index
    %35 = vector.load %arg7[%c10, %c48] : memref<40x484xf32, #tpu.memory_space<vmem>>, vector<5x346xf32>
    %36 = arith.addf %34, %35 : vector<5x346xf32>
    %c0_36 = arith.constant 0 : index
    %c0_37 = arith.constant 0 : index
    %c0_38 = arith.constant 0 : index
    %37 = vector.load %arg6[%c0_36, %c0_37, %c0_38] : memref<1x5x346xf32, #tpu.memory_space<vmem>>, vector<1x5x346xf32>
    %38 = vector.shape_cast %37 : vector<1x5x346xf32> to vector<5x346xf32>
    %39 = vector.shape_cast %36 : vector<5x346xf32> to vector<1x5x346xf32>
    tpu.vector_store %arg6[%c0_36, %c0_37, %c0_38], %39 {strides = array<i32>} : memref<1x5x346xf32, #tpu.memory_space<vmem>>, vector<1x5x346xf32>,
    %c0_39 = arith.constant 0 : index
    %c0_40 = arith.constant 0 : index
    %c0_41 = arith.constant 0 : index
    %40 = vector.load %arg6[%c0_39, %c0_40, %c0_41] : memref<1x5x346xf32, #tpu.memory_space<vmem>>, vector<1x5x346xf32>
    %41 = vector.shape_cast %40 : vector<1x5x346xf32> to vector<5x346xf32>
    %c15 = arith.constant 15 : index
    %c68 = arith.constant 68 : index
    %42 = vector.load %arg7[%c15, %c68] : memref<40x484xf32, #tpu.memory_space<vmem>>, vector<5x346xf32>
    %43 = arith.addf %41, %42 : vector<5x346xf32>
    %c0_42 = arith.constant 0 : index
    %c0_43 = arith.constant 0 : index
    %c0_44 = arith.constant 0 : index
    %44 = vector.load %arg6[%c0_42, %c0_43, %c0_44] : memref<1x5x346xf32, #tpu.memory_space<vmem>>, vector<1x5x346xf32>
    %45 = vector.shape_cast %44 : vector<1x5x346xf32> to vector<5x346xf32>
    %46 = vector.shape_cast %43 : vector<5x346xf32> to vector<1x5x346xf32>
    tpu.vector_store %arg6[%c0_42, %c0_43, %c0_44], %46 {strides = array<i32>} : memref<1x5x346xf32, #tpu.memory_space<vmem>>, vector<1x5x346xf32>,
    %c0_45 = arith.constant 0 : index
    %c0_46 = arith.constant 0 : index
    %c0_47 = arith.constant 0 : index
    %47 = vector.load %arg6[%c0_45, %c0_46, %c0_47] : memref<1x5x346xf32, #tpu.memory_space<vmem>>, vector<1x5x346xf32>
    %48 = vector.shape_cast %47 : vector<1x5x346xf32> to vector<5x346xf32>
    %c20 = arith.constant 20 : index
    %c70 = arith.constant 70 : index
    %49 = vector.load %arg7[%c20, %c70] : memref<40x484xf32, #tpu.memory_space<vmem>>, vector<5x346xf32>
    %50 = arith.addf %48, %49 : vector<5x346xf32>
    %c0_48 = arith.constant 0 : index
    %c0_49 = arith.constant 0 : index
    %c0_50 = arith.constant 0 : index
    %51 = vector.load %arg6[%c0_48, %c0_49, %c0_50] : memref<1x5x346xf32, #tpu.memory_space<vmem>>, vector<1x5x346xf32>
    %52 = vector.shape_cast %51 : vector<1x5x346xf32> to vector<5x346xf32>
    %53 = vector.shape_cast %50 : vector<5x346xf32> to vector<1x5x346xf32>
    tpu.vector_store %arg6[%c0_48, %c0_49, %c0_50], %53 {strides = array<i32>} : memref<1x5x346xf32, #tpu.memory_space<vmem>>, vector<1x5x346xf32>,
    %c0_51 = arith.constant 0 : index
    %c0_52 = arith.constant 0 : index
    %c0_53 = arith.constant 0 : index
    %54 = vector.load %arg6[%c0_51, %c0_52, %c0_53] : memref<1x5x346xf32, #tpu.memory_space<vmem>>, vector<1x5x346xf32>
    %55 = vector.shape_cast %54 : vector<1x5x346xf32> to vector<5x346xf32>
    %c25 = arith.constant 25 : index
    %c90 = arith.constant 90 : index
    %56 = vector.load %arg7[%c25, %c90] : memref<40x484xf32, #tpu.memory_space<vmem>>, vector<5x346xf32>
    %57 = arith.addf %55, %56 : vector<5x346xf32>
    %c0_54 = arith.constant 0 : index
    %c0_55 = arith.constant 0 : index
    %c0_56 = arith.constant 0 : index
    %58 = vector.load %arg6[%c0_54, %c0_55, %c0_56] : memref<1x5x346xf32, #tpu.memory_space<vmem>>, vector<1x5x346xf32>
    %59 = vector.shape_cast %58 : vector<1x5x346xf32> to vector<5x346xf32>
    %60 = vector.shape_cast %57 : vector<5x346xf32> to vector<1x5x346xf32>
    tpu.vector_store %arg6[%c0_54, %c0_55, %c0_56], %60 {strides = array<i32>} : memref<1x5x346xf32, #tpu.memory_space<vmem>>, vector<1x5x346xf32>,
    %c0_57 = arith.constant 0 : index
    %c0_58 = arith.constant 0 : index
    %c0_59 = arith.constant 0 : index
    %61 = vector.load %arg6[%c0_57, %c0_58, %c0_59] : memref<1x5x346xf32, #tpu.memory_space<vmem>>, vector<1x5x346xf32>
    %62 = vector.shape_cast %61 : vector<1x5x346xf32> to vector<5x346xf32>
    %c30 = arith.constant 30 : index
    %c91 = arith.constant 91 : index
    %63 = vector.load %arg7[%c30, %c91] : memref<40x484xf32, #tpu.memory_space<vmem>>, vector<5x346xf32>
    %64 = arith.addf %62, %63 : vector<5x346xf32>
    %c0_60 = arith.constant 0 : index
    %c0_61 = arith.constant 0 : index
    %c0_62 = arith.constant 0 : index
    %65 = vector.load %arg6[%c0_60, %c0_61, %c0_62] : memref<1x5x346xf32, #tpu.memory_space<vmem>>, vector<1x5x346xf32>
    %66 = vector.shape_cast %65 : vector<1x5x346xf32> to vector<5x346xf32>
    %67 = vector.shape_cast %64 : vector<5x346xf32> to vector<1x5x346xf32>
    tpu.vector_store %arg6[%c0_60, %c0_61, %c0_62], %67 {strides = array<i32>} : memref<1x5x346xf32, #tpu.memory_space<vmem>>, vector<1x5x346xf32>,
    %c0_63 = arith.constant 0 : index
    %c0_64 = arith.constant 0 : index
    %c0_65 = arith.constant 0 : index
    %68 = vector.load %arg6[%c0_63, %c0_64, %c0_65] : memref<1x5x346xf32, #tpu.memory_space<vmem>>, vector<1x5x346xf32>
    %69 = vector.shape_cast %68 : vector<1x5x346xf32> to vector<5x346xf32>
    %c35 = arith.constant 35 : index
    %c92 = arith.constant 92 : index
    %70 = vector.load %arg7[%c35, %c92] : memref<40x484xf32, #tpu.memory_space<vmem>>, vector<5x346xf32>
    %71 = arith.addf %69, %70 : vector<5x346xf32>
    %c0_66 = arith.constant 0 : index
    %c0_67 = arith.constant 0 : index
    %c0_68 = arith.constant 0 : index
    %72 = vector.load %arg6[%c0_66, %c0_67, %c0_68] : memref<1x5x346xf32, #tpu.memory_space<vmem>>, vector<1x5x346xf32>
    %73 = vector.shape_cast %72 : vector<1x5x346xf32> to vector<5x346xf32>
    %74 = vector.shape_cast %71 : vector<5x346xf32> to vector<1x5x346xf32>
    tpu.vector_store %arg6[%c0_66, %c0_67, %c0_68], %74 {strides = array<i32>} : memref<1x5x346xf32, #tpu.memory_space<vmem>>, vector<1x5x346xf32>,
    %c1 = arith.constant 1 : index
    %c0_69 = arith.constant 0 : index
    %c0_70 = arith.constant 0 : index
    %75 = vector.load %arg3[%c1, %c0_69, %c0_70] : memref<3x40x4xf32, #tpu.memory_space<vmem>>, vector<1x40x4xf32>
    %76 = vector.shape_cast %75 : vector<1x40x4xf32> to vector<40x4xf32>
    %cst_71 = arith.constant dense<0.000000e+00> : vector<40x484xf32>
    %77 = tpu.matmul %76, %4, %cst_71 {dimension_numbers = #tpu.dot_dimension_numbers<[1], [0], [0], [1], [0, 0, 1, 1], [], []>} : vector<40x4xf32>, vector<4x484xf32>, vector<40x484xf32> -> vector<40x484xf32>
    %c0_72 = arith.constant 0 : index
    %c0_73 = arith.constant 0 : index
    %78 = vector.load %arg7[%c0_72, %c0_73] : memref<40x484xf32, #tpu.memory_space<vmem>>, vector<40x484xf32>
    tpu.vector_store %arg7[%c0_72, %c0_73], %77 {strides = array<i32>} : memref<40x484xf32, #tpu.memory_space<vmem>>, vector<40x484xf32>,
    %c0_74 = arith.constant 0 : index
    %c0_75 = arith.constant 0 : index
    %c0_76 = arith.constant 0 : index
    %79 = vector.load %arg6[%c0_74, %c0_75, %c0_76] : memref<1x5x346xf32, #tpu.memory_space<vmem>>, vector<1x5x346xf32>
    %80 = vector.shape_cast %79 : vector<1x5x346xf32> to vector<5x346xf32>
    %c0_77 = arith.constant 0 : index
    %c23 = arith.constant 23 : index
    %81 = vector.load %arg7[%c0_77, %c23] : memref<40x484xf32, #tpu.memory_space<vmem>>, vector<5x346xf32>
    %82 = arith.addf %80, %81 : vector<5x346xf32>
    %c0_78 = arith.constant 0 : index
    %c0_79 = arith.constant 0 : index
    %c0_80 = arith.constant 0 : index
    %83 = vector.load %arg6[%c0_78, %c0_79, %c0_80] : memref<1x5x346xf32, #tpu.memory_space<vmem>>, vector<1x5x346xf32>
    %84 = vector.shape_cast %83 : vector<1x5x346xf32> to vector<5x346xf32>
    %85 = vector.shape_cast %82 : vector<5x346xf32> to vector<1x5x346xf32>
    tpu.vector_store %arg6[%c0_78, %c0_79, %c0_80], %85 {strides = array<i32>} : memref<1x5x346xf32, #tpu.memory_space<vmem>>, vector<1x5x346xf32>,
    %c0_81 = arith.constant 0 : index
    %c0_82 = arith.constant 0 : index
    %c0_83 = arith.constant 0 : index
    %86 = vector.load %arg6[%c0_81, %c0_82, %c0_83] : memref<1x5x346xf32, #tpu.memory_space<vmem>>, vector<1x5x346xf32>
    %87 = vector.shape_cast %86 : vector<1x5x346xf32> to vector<5x346xf32>
    %c5_84 = arith.constant 5 : index
    %c25_85 = arith.constant 25 : index
    %88 = vector.load %arg7[%c5_84, %c25_85] : memref<40x484xf32, #tpu.memory_space<vmem>>, vector<5x346xf32>
    %89 = arith.addf %87, %88 : vector<5x346xf32>
    %c0_86 = arith.constant 0 : index
    %c0_87 = arith.constant 0 : index
    %c0_88 = arith.constant 0 : index
    %90 = vector.load %arg6[%c0_86, %c0_87, %c0_88] : memref<1x5x346xf32, #tpu.memory_space<vmem>>, vector<1x5x346xf32>
    %91 = vector.shape_cast %90 : vector<1x5x346xf32> to vector<5x346xf32>
    %92 = vector.shape_cast %89 : vector<5x346xf32> to vector<1x5x346xf32>
    tpu.vector_store %arg6[%c0_86, %c0_87, %c0_88], %92 {strides = array<i32>} : memref<1x5x346xf32, #tpu.memory_space<vmem>>, vector<1x5x346xf32>,
    %c0_89 = arith.constant 0 : index
    %c0_90 = arith.constant 0 : index
    %c0_91 = arith.constant 0 : index
    %93 = vector.load %arg6[%c0_89, %c0_90, %c0_91] : memref<1x5x346xf32, #tpu.memory_space<vmem>>, vector<1x5x346xf32>
    %94 = vector.shape_cast %93 : vector<1x5x346xf32> to vector<5x346xf32>
    %c10_92 = arith.constant 10 : index
    %c27 = arith.constant 27 : index
    %95 = vector.load %arg7[%c10_92, %c27] : memref<40x484xf32, #tpu.memory_space<vmem>>, vector<5x346xf32>
    %96 = arith.addf %94, %95 : vector<5x346xf32>
    %c0_93 = arith.constant 0 : index
    %c0_94 = arith.constant 0 : index
    %c0_95 = arith.constant 0 : index
    %97 = vector.load %arg6[%c0_93, %c0_94, %c0_95] : memref<1x5x346xf32, #tpu.memory_space<vmem>>, vector<1x5x346xf32>
    %98 = vector.shape_cast %97 : vector<1x5x346xf32> to vector<5x346xf32>
    %99 = vector.shape_cast %96 : vector<5x346xf32> to vector<1x5x346xf32>
    tpu.vector_store %arg6[%c0_93, %c0_94, %c0_95], %99 {strides = array<i32>} : memref<1x5x346xf32, #tpu.memory_space<vmem>>, vector<1x5x346xf32>,
    %c0_96 = arith.constant 0 : index
    %c0_97 = arith.constant 0 : index
    %c0_98 = arith.constant 0 : index
    %100 = vector.load %arg6[%c0_96, %c0_97, %c0_98] : memref<1x5x346xf32, #tpu.memory_space<vmem>>, vector<1x5x346xf32>
    %101 = vector.shape_cast %100 : vector<1x5x346xf32> to vector<5x346xf32>
    %c15_99 = arith.constant 15 : index
    %c67 = arith.constant 67 : index
    %102 = vector.load %arg7[%c15_99, %c67] : memref<40x484xf32, #tpu.memory_space<vmem>>, vector<5x346xf32>
    %103 = arith.addf %101, %102 : vector<5x346xf32>
    %c0_100 = arith.constant 0 : index
    %c0_101 = arith.constant 0 : index
    %c0_102 = arith.constant 0 : index
    %104 = vector.load %arg6[%c0_100, %c0_101, %c0_102] : memref<1x5x346xf32, #tpu.memory_space<vmem>>, vector<1x5x346xf32>
    %105 = vector.shape_cast %104 : vector<1x5x346xf32> to vector<5x346xf32>
    %106 = vector.shape_cast %103 : vector<5x346xf32> to vector<1x5x346xf32>
    tpu.vector_store %arg6[%c0_100, %c0_101, %c0_102], %106 {strides = array<i32>} : memref<1x5x346xf32, #tpu.memory_space<vmem>>, vector<1x5x346xf32>,
    %c0_103 = arith.constant 0 : index
    %c0_104 = arith.constant 0 : index
    %c0_105 = arith.constant 0 : index
    %107 = vector.load %arg6[%c0_103, %c0_104, %c0_105] : memref<1x5x346xf32, #tpu.memory_space<vmem>>, vector<1x5x346xf32>
    %108 = vector.shape_cast %107 : vector<1x5x346xf32> to vector<5x346xf32>
    %c20_106 = arith.constant 20 : index
    %c71 = arith.constant 71 : index
    %109 = vector.load %arg7[%c20_106, %c71] : memref<40x484xf32, #tpu.memory_space<vmem>>, vector<5x346xf32>
    %110 = arith.addf %108, %109 : vector<5x346xf32>
    %c0_107 = arith.constant 0 : index
    %c0_108 = arith.constant 0 : index
    %c0_109 = arith.constant 0 : index
    %111 = vector.load %arg6[%c0_107, %c0_108, %c0_109] : memref<1x5x346xf32, #tpu.memory_space<vmem>>, vector<1x5x346xf32>
    %112 = vector.shape_cast %111 : vector<1x5x346xf32> to vector<5x346xf32>
    %113 = vector.shape_cast %110 : vector<5x346xf32> to vector<1x5x346xf32>
    tpu.vector_store %arg6[%c0_107, %c0_108, %c0_109], %113 {strides = array<i32>} : memref<1x5x346xf32, #tpu.memory_space<vmem>>, vector<1x5x346xf32>,
    %c0_110 = arith.constant 0 : index
    %c0_111 = arith.constant 0 : index
    %c0_112 = arith.constant 0 : index
    %114 = vector.load %arg6[%c0_110, %c0_111, %c0_112] : memref<1x5x346xf32, #tpu.memory_space<vmem>>, vector<1x5x346xf32>
    %115 = vector.shape_cast %114 : vector<1x5x346xf32> to vector<5x346xf32>
    %c25_113 = arith.constant 25 : index
    %c111 = arith.constant 111 : index
    %116 = vector.load %arg7[%c25_113, %c111] : memref<40x484xf32, #tpu.memory_space<vmem>>, vector<5x346xf32>
    %117 = arith.addf %115, %116 : vector<5x346xf32>
    %c0_114 = arith.constant 0 : index
    %c0_115 = arith.constant 0 : index
    %c0_116 = arith.constant 0 : index
    %118 = vector.load %arg6[%c0_114, %c0_115, %c0_116] : memref<1x5x346xf32, #tpu.memory_space<vmem>>, vector<1x5x346xf32>
    %119 = vector.shape_cast %118 : vector<1x5x346xf32> to vector<5x346xf32>
    %120 = vector.shape_cast %117 : vector<5x346xf32> to vector<1x5x346xf32>
    tpu.vector_store %arg6[%c0_114, %c0_115, %c0_116], %120 {strides = array<i32>} : memref<1x5x346xf32, #tpu.memory_space<vmem>>, vector<1x5x346xf32>,
    %c0_117 = arith.constant 0 : index
    %c0_118 = arith.constant 0 : index
    %c0_119 = arith.constant 0 : index
    %121 = vector.load %arg6[%c0_117, %c0_118, %c0_119] : memref<1x5x346xf32, #tpu.memory_space<vmem>>, vector<1x5x346xf32>
    %122 = vector.shape_cast %121 : vector<1x5x346xf32> to vector<5x346xf32>
    %c30_120 = arith.constant 30 : index
    %c113 = arith.constant 113 : index
    %123 = vector.load %arg7[%c30_120, %c113] : memref<40x484xf32, #tpu.memory_space<vmem>>, vector<5x346xf32>
    %124 = arith.addf %122, %123 : vector<5x346xf32>
    %c0_121 = arith.constant 0 : index
    %c0_122 = arith.constant 0 : index
    %c0_123 = arith.constant 0 : index
    %125 = vector.load %arg6[%c0_121, %c0_122, %c0_123] : memref<1x5x346xf32, #tpu.memory_space<vmem>>, vector<1x5x346xf32>
    %126 = vector.shape_cast %125 : vector<1x5x346xf32> to vector<5x346xf32>
    %127 = vector.shape_cast %124 : vector<5x346xf32> to vector<1x5x346xf32>
    tpu.vector_store %arg6[%c0_121, %c0_122, %c0_123], %127 {strides = array<i32>} : memref<1x5x346xf32, #tpu.memory_space<vmem>>, vector<1x5x346xf32>,
    %c0_124 = arith.constant 0 : index
    %c0_125 = arith.constant 0 : index
    %c0_126 = arith.constant 0 : index
    %128 = vector.load %arg6[%c0_124, %c0_125, %c0_126] : memref<1x5x346xf32, #tpu.memory_space<vmem>>, vector<1x5x346xf32>
    %129 = vector.shape_cast %128 : vector<1x5x346xf32> to vector<5x346xf32>
    %c35_127 = arith.constant 35 : index
    %c115 = arith.constant 115 : index
    %130 = vector.load %arg7[%c35_127, %c115] : memref<40x484xf32, #tpu.memory_space<vmem>>, vector<5x346xf32>
    %131 = arith.addf %129, %130 : vector<5x346xf32>
    %c0_128 = arith.constant 0 : index
    %c0_129 = arith.constant 0 : index
    %c0_130 = arith.constant 0 : index
    %132 = vector.load %arg6[%c0_128, %c0_129, %c0_130] : memref<1x5x346xf32, #tpu.memory_space<vmem>>, vector<1x5x346xf32>
    %133 = vector.shape_cast %132 : vector<1x5x346xf32> to vector<5x346xf32>
    %134 = vector.shape_cast %131 : vector<5x346xf32> to vector<1x5x346xf32>
    tpu.vector_store %arg6[%c0_128, %c0_129, %c0_130], %134 {strides = array<i32>} : memref<1x5x346xf32, #tpu.memory_space<vmem>>, vector<1x5x346xf32>,
    %c2 = arith.constant 2 : index
    %c0_131 = arith.constant 0 : index
    %c0_132 = arith.constant 0 : index
    %135 = vector.load %arg3[%c2, %c0_131, %c0_132] : memref<3x40x4xf32, #tpu.memory_space<vmem>>, vector<1x40x4xf32>
    %136 = vector.shape_cast %135 : vector<1x40x4xf32> to vector<40x4xf32>
    %cst_133 = arith.constant dense<0.000000e+00> : vector<40x484xf32>
    %137 = tpu.matmul %136, %4, %cst_133 {dimension_numbers = #tpu.dot_dimension_numbers<[1], [0], [0], [1], [0, 0, 1, 1], [], []>} : vector<40x4xf32>, vector<4x484xf32>, vector<40x484xf32> -> vector<40x484xf32>
    %c0_134 = arith.constant 0 : index
    %c0_135 = arith.constant 0 : index
    %138 = vector.load %arg7[%c0_134, %c0_135] : memref<40x484xf32, #tpu.memory_space<vmem>>, vector<40x484xf32>
    tpu.vector_store %arg7[%c0_134, %c0_135], %137 {strides = array<i32>} : memref<40x484xf32, #tpu.memory_space<vmem>>, vector<40x484xf32>,
    %c0_136 = arith.constant 0 : index
    %c0_137 = arith.constant 0 : index
    %c0_138 = arith.constant 0 : index
    %139 = vector.load %arg6[%c0_136, %c0_137, %c0_138] : memref<1x5x346xf32, #tpu.memory_space<vmem>>, vector<1x5x346xf32>
    %140 = vector.shape_cast %139 : vector<1x5x346xf32> to vector<5x346xf32>
    %c0_139 = arith.constant 0 : index
    %c0_140 = arith.constant 0 : index
    %141 = vector.load %arg7[%c0_139, %c0_140] : memref<40x484xf32, #tpu.memory_space<vmem>>, vector<5x346xf32>
    %142 = arith.addf %140, %141 : vector<5x346xf32>
    %c0_141 = arith.constant 0 : index
    %c0_142 = arith.constant 0 : index
    %c0_143 = arith.constant 0 : index
    %143 = vector.load %arg6[%c0_141, %c0_142, %c0_143] : memref<1x5x346xf32, #tpu.memory_space<vmem>>, vector<1x5x346xf32>
    %144 = vector.shape_cast %143 : vector<1x5x346xf32> to vector<5x346xf32>
    %145 = vector.shape_cast %142 : vector<5x346xf32> to vector<1x5x346xf32>
    tpu.vector_store %arg6[%c0_141, %c0_142, %c0_143], %145 {strides = array<i32>} : memref<1x5x346xf32, #tpu.memory_space<vmem>>, vector<1x5x346xf32>,
    %c0_144 = arith.constant 0 : index
    %c0_145 = arith.constant 0 : index
    %c0_146 = arith.constant 0 : index
    %146 = vector.load %arg6[%c0_144, %c0_145, %c0_146] : memref<1x5x346xf32, #tpu.memory_space<vmem>>, vector<1x5x346xf32>
    %147 = vector.shape_cast %146 : vector<1x5x346xf32> to vector<5x346xf32>
    %c5_147 = arith.constant 5 : index
    %c3 = arith.constant 3 : index
    %148 = vector.load %arg7[%c5_147, %c3] : memref<40x484xf32, #tpu.memory_space<vmem>>, vector<5x346xf32>
    %149 = arith.addf %147, %148 : vector<5x346xf32>
    %c0_148 = arith.constant 0 : index
    %c0_149 = arith.constant 0 : index
    %c0_150 = arith.constant 0 : index
    %150 = vector.load %arg6[%c0_148, %c0_149, %c0_150] : memref<1x5x346xf32, #tpu.memory_space<vmem>>, vector<1x5x346xf32>
    %151 = vector.shape_cast %150 : vector<1x5x346xf32> to vector<5x346xf32>
    %152 = vector.shape_cast %149 : vector<5x346xf32> to vector<1x5x346xf32>
    tpu.vector_store %arg6[%c0_148, %c0_149, %c0_150], %152 {strides = array<i32>} : memref<1x5x346xf32, #tpu.memory_space<vmem>>, vector<1x5x346xf32>,
    %c0_151 = arith.constant 0 : index
    %c0_152 = arith.constant 0 : index
    %c0_153 = arith.constant 0 : index
    %153 = vector.load %arg6[%c0_151, %c0_152, %c0_153] : memref<1x5x346xf32, #tpu.memory_space<vmem>>, vector<1x5x346xf32>
    %154 = vector.shape_cast %153 : vector<1x5x346xf32> to vector<5x346xf32>
    %c10_154 = arith.constant 10 : index
    %c6 = arith.constant 6 : index
    %155 = vector.load %arg7[%c10_154, %c6] : memref<40x484xf32, #tpu.memory_space<vmem>>, vector<5x346xf32>
    %156 = arith.addf %154, %155 : vector<5x346xf32>
    %c0_155 = arith.constant 0 : index
    %c0_156 = arith.constant 0 : index
    %c0_157 = arith.constant 0 : index
    %157 = vector.load %arg6[%c0_155, %c0_156, %c0_157] : memref<1x5x346xf32, #tpu.memory_space<vmem>>, vector<1x5x346xf32>
    %158 = vector.shape_cast %157 : vector<1x5x346xf32> to vector<5x346xf32>
    %159 = vector.shape_cast %156 : vector<5x346xf32> to vector<1x5x346xf32>
    tpu.vector_store %arg6[%c0_155, %c0_156, %c0_157], %159 {strides = array<i32>} : memref<1x5x346xf32, #tpu.memory_space<vmem>>, vector<1x5x346xf32>,
    %c0_158 = arith.constant 0 : index
    %c0_159 = arith.constant 0 : index
    %c0_160 = arith.constant 0 : index
    %160 = vector.load %arg6[%c0_158, %c0_159, %c0_160] : memref<1x5x346xf32, #tpu.memory_space<vmem>>, vector<1x5x346xf32>
    %161 = vector.shape_cast %160 : vector<1x5x346xf32> to vector<5x346xf32>
    %c15_161 = arith.constant 15 : index
    %c66 = arith.constant 66 : index
    %162 = vector.load %arg7[%c15_161, %c66] : memref<40x484xf32, #tpu.memory_space<vmem>>, vector<5x346xf32>
    %163 = arith.addf %161, %162 : vector<5x346xf32>
    %c0_162 = arith.constant 0 : index
    %c0_163 = arith.constant 0 : index
    %c0_164 = arith.constant 0 : index
    %164 = vector.load %arg6[%c0_162, %c0_163, %c0_164] : memref<1x5x346xf32, #tpu.memory_space<vmem>>, vector<1x5x346xf32>
    %165 = vector.shape_cast %164 : vector<1x5x346xf32> to vector<5x346xf32>
    %166 = vector.shape_cast %163 : vector<5x346xf32> to vector<1x5x346xf32>
    tpu.vector_store %arg6[%c0_162, %c0_163, %c0_164], %166 {strides = array<i32>} : memref<1x5x346xf32, #tpu.memory_space<vmem>>, vector<1x5x346xf32>,
    %c0_165 = arith.constant 0 : index
    %c0_166 = arith.constant 0 : index
    %c0_167 = arith.constant 0 : index
    %167 = vector.load %arg6[%c0_165, %c0_166, %c0_167] : memref<1x5x346xf32, #tpu.memory_space<vmem>>, vector<1x5x346xf32>
    %168 = vector.shape_cast %167 : vector<1x5x346xf32> to vector<5x346xf32>
    %c20_168 = arith.constant 20 : index
    %c72 = arith.constant 72 : index
    %169 = vector.load %arg7[%c20_168, %c72] : memref<40x484xf32, #tpu.memory_space<vmem>>, vector<5x346xf32>
    %170 = arith.addf %168, %169 : vector<5x346xf32>
    %c0_169 = arith.constant 0 : index
    %c0_170 = arith.constant 0 : index
    %c0_171 = arith.constant 0 : index
    %171 = vector.load %arg6[%c0_169, %c0_170, %c0_171] : memref<1x5x346xf32, #tpu.memory_space<vmem>>, vector<1x5x346xf32>
    %172 = vector.shape_cast %171 : vector<1x5x346xf32> to vector<5x346xf32>
    %173 = vector.shape_cast %170 : vector<5x346xf32> to vector<1x5x346xf32>
    tpu.vector_store %arg6[%c0_169, %c0_170, %c0_171], %173 {strides = array<i32>} : memref<1x5x346xf32, #tpu.memory_space<vmem>>, vector<1x5x346xf32>,
    %c0_172 = arith.constant 0 : index
    %c0_173 = arith.constant 0 : index
    %c0_174 = arith.constant 0 : index
    %174 = vector.load %arg6[%c0_172, %c0_173, %c0_174] : memref<1x5x346xf32, #tpu.memory_space<vmem>>, vector<1x5x346xf32>
    %175 = vector.shape_cast %174 : vector<1x5x346xf32> to vector<5x346xf32>
    %c25_175 = arith.constant 25 : index
    %c132 = arith.constant 132 : index
    %176 = vector.load %arg7[%c25_175, %c132] : memref<40x484xf32, #tpu.memory_space<vmem>>, vector<5x346xf32>
    %177 = arith.addf %175, %176 : vector<5x346xf32>
    %c0_176 = arith.constant 0 : index
    %c0_177 = arith.constant 0 : index
    %c0_178 = arith.constant 0 : index
    %178 = vector.load %arg6[%c0_176, %c0_177, %c0_178] : memref<1x5x346xf32, #tpu.memory_space<vmem>>, vector<1x5x346xf32>
    %179 = vector.shape_cast %178 : vector<1x5x346xf32> to vector<5x346xf32>
    %180 = vector.shape_cast %177 : vector<5x346xf32> to vector<1x5x346xf32>
    tpu.vector_store %arg6[%c0_176, %c0_177, %c0_178], %180 {strides = array<i32>} : memref<1x5x346xf32, #tpu.memory_space<vmem>>, vector<1x5x346xf32>,
    %c0_179 = arith.constant 0 : index
    %c0_180 = arith.constant 0 : index
    %c0_181 = arith.constant 0 : index
    %181 = vector.load %arg6[%c0_179, %c0_180, %c0_181] : memref<1x5x346xf32, #tpu.memory_space<vmem>>, vector<1x5x346xf32>
    %182 = vector.shape_cast %181 : vector<1x5x346xf32> to vector<5x346xf32>
    %c30_182 = arith.constant 30 : index
    %c135 = arith.constant 135 : index
    %183 = vector.load %arg7[%c30_182, %c135] : memref<40x484xf32, #tpu.memory_space<vmem>>, vector<5x346xf32>
    %184 = arith.addf %182, %183 : vector<5x346xf32>
    %c0_183 = arith.constant 0 : index
    %c0_184 = arith.constant 0 : index
    %c0_185 = arith.constant 0 : index
    %185 = vector.load %arg6[%c0_183, %c0_184, %c0_185] : memref<1x5x346xf32, #tpu.memory_space<vmem>>, vector<1x5x346xf32>
    %186 = vector.shape_cast %185 : vector<1x5x346xf32> to vector<5x346xf32>
    %187 = vector.shape_cast %184 : vector<5x346xf32> to vector<1x5x346xf32>
    tpu.vector_store %arg6[%c0_183, %c0_184, %c0_185], %187 {strides = array<i32>} : memref<1x5x346xf32, #tpu.memory_space<vmem>>, vector<1x5x346xf32>,
    %c0_186 = arith.constant 0 : index
    %c0_187 = arith.constant 0 : index
    %c0_188 = arith.constant 0 : index
    %188 = vector.load %arg6[%c0_186, %c0_187, %c0_188] : memref<1x5x346xf32, #tpu.memory_space<vmem>>, vector<1x5x346xf32>
    %189 = vector.shape_cast %188 : vector<1x5x346xf32> to vector<5x346xf32>
    %c35_189 = arith.constant 35 : index
    %c138 = arith.constant 138 : index
    %190 = vector.load %arg7[%c35_189, %c138] : memref<40x484xf32, #tpu.memory_space<vmem>>, vector<5x346xf32>
    %191 = arith.addf %189, %190 : vector<5x346xf32>
    %c0_190 = arith.constant 0 : index
    %c0_191 = arith.constant 0 : index
    %c0_192 = arith.constant 0 : index
    %192 = vector.load %arg6[%c0_190, %c0_191, %c0_192] : memref<1x5x346xf32, #tpu.memory_space<vmem>>, vector<1x5x346xf32>
    %193 = vector.shape_cast %192 : vector<1x5x346xf32> to vector<5x346xf32>
    %194 = vector.shape_cast %191 : vector<5x346xf32> to vector<1x5x346xf32>
    tpu.vector_store %arg6[%c0_190, %c0_191, %c0_192], %194 {strides = array<i32>} : memref<1x5x346xf32, #tpu.memory_space<vmem>>, vector<1x5x346xf32>,
    %c0_i32_193 = arith.constant 0 : i32
    %195 = arith.cmpi eq, %arg1, %c0_i32_193 : i32
    %196 = arith.extui %195 : i1 to i32
    %c0_i32_194 = arith.constant 0 : i32
    %197 = arith.cmpi ne, %196, %c0_i32_194 : i32
    scf.if %197 {
      %c0_195 = arith.constant 0 : index
      %c0_196 = arith.constant 0 : index
      %c0_197 = arith.constant 0 : index
      %198 = vector.load %arg6[%c0_195, %c0_196, %c0_197] : memref<1x5x346xf32, #tpu.memory_space<vmem>>, vector<1x5x346xf32>
      %199 = vector.shape_cast %198 : vector<1x5x346xf32> to vector<5x346xf32>
      %c0_198 = arith.constant 0 : index
      %c0_199 = arith.constant 0 : index
      %200 = vector.load %arg5[%c0_198, %c0_199] : memref<5x1xf32, #tpu.memory_space<vmem>>, vector<5x1xf32>
      %201 = vector.broadcast %200 : vector<5x1xf32> to vector<5x346xf32>
      %202 = arith.addf %199, %201 : vector<5x346xf32>
      %c0_200 = arith.constant 0 : index
      %c0_201 = arith.constant 0 : index
      %c0_202 = arith.constant 0 : index
      %203 = vector.load %arg6[%c0_200, %c0_201, %c0_202] : memref<1x5x346xf32, #tpu.memory_space<vmem>>, vector<1x5x346xf32>
      %204 = vector.shape_cast %203 : vector<1x5x346xf32> to vector<5x346xf32>
      %205 = vector.shape_cast %202 : vector<5x346xf32> to vector<1x5x346xf32>
      tpu.vector_store %arg6[%c0_200, %c0_201, %c0_202], %205 {strides = array<i32>} : memref<1x5x346xf32, #tpu.memory_space<vmem>>, vector<1x5x346xf32>,
    } else {
    }
    return
  }
  func.func @transform_0(%arg0: i32, %arg1: i32) -> (i32, i32, i32) {
    %c0_i32 = arith.constant 0 : i32
    %c0_i32_0 = arith.constant 0 : i32
    return %arg0, %arg1, %c0_i32 : i32, i32, i32
  }
  func.func @transform_1(%arg0: i32, %arg1: i32) -> (i32, i32, i32) {
    %c0_i32 = arith.constant 0 : i32
    %c0_i32_0 = arith.constant 0 : i32
    %c0_i32_1 = arith.constant 0 : i32
    return %c0_i32, %c0_i32_0, %arg1 : i32, i32, i32
  }
  func.func @transform_2(%arg0: i32, %arg1: i32) -> (i32, i32) {
    %c0_i32 = arith.constant 0 : i32
    %c0_i32_0 = arith.constant 0 : i32
    return %c0_i32, %arg1 : i32, i32
  }
  func.func @transform_3(%arg0: i32, %arg1: i32) -> (i32, i32) {
    %c0_i32 = arith.constant 0 : i32
    %c0_i32_0 = arith.constant 0 : i32
    %c0_i32_1 = arith.constant 0 : i32
    return %c0_i32, %c0_i32_0 : i32, i32
  }
  func.func @transform_4(%arg0: i32, %arg1: i32) -> (i32, i32, i32) {
    %c0_i32 = arith.constant 0 : i32
    %c0_i32_0 = arith.constant 0 : i32
    %c0_i32_1 = arith.constant 0 : i32
    return %arg0, %c0_i32, %c0_i32_0 : i32, i32, i32
  }
}

</mosaic_0001>

<llo_original>
// kernel: tpu_custom_call.1
$region0: #{tpu_custom_call.1}
  #allocation0 [shape = 'u32[]', space=smem, size = 0x4, offset = 0x4, fixed_abs, tag = 'smem constant byte address 0x4 - core index']
  #allocation1 [shape = 'u32[144,128]{1,0:T(1,128)}', space=vmem, size = 0x12000, scoped, tag = 'internal scratch']
  #allocation2 [shape = 'f32[40,484]{1,0:T(8,128)}', space=vmem, size = 0x14000, scoped, tag = 'scratch operand']
  %s0 = inlined_call_operand.vmem [shape: f32[2,4,484], index: 0, kind: input, shape index: {}]
  %s1 = inlined_call_operand.vmem [shape: f32[3,40,4], index: 1, kind: input, shape index: {}]
  %s2 = inlined_call_operand.vmem [shape: f32[5,4], index: 2, kind: input, shape index: {}]
  %s3 = inlined_call_operand.vmem [shape: f32[5,1], index: 3, kind: input, shape index: {}]
  %s4 = inlined_call_operand.vmem [shape: f32[2,5,346], index: 4, kind: output, shape index: {}]
  %s5 = sld [smem:[#allocation0]]
  $region57: #{tpu_custom_call.1} parent=0
    _
  %s7 = ssub.s32 1, %s5
  %s8 = scalar_select 0, %s7, %s5
  loop: start=0, step=1, limit=4
  $region2: #{tpu_custom_call.1} parent=0 // loop_pre_header
    _
  $region3: #{tpu_custom_call.1} parent=0 // loop_header
    %s10 = sphi 0, %s14
    %p11 = scmp.ge.s32.totalorder %s10, 4
    %s17 = sphi 0, %s29
    %s18 = sphi 0, %s25
    %s19 = sphi 0, %s17
    %s20 = sphi 0, %s18
    %s21 = sphi 0, %s19
    %s22 = sphi 0, %s20
    %s34 = sphi 0, %s36
    %s37 = sphi 0, %s34
    %s38 = sphi 0, %s37
    %s54 = sphi 0, %s38
    %s60 = sphi 0, %s62
    %s63 = sphi 0, %s60
    %s64 = sphi 0, %s63
    %s80 = sphi 0, %s64
    %s86 = sphi 0, %s88
    %s89 = sphi 0, %s86
    %s90 = sphi 0, %s89
    %s106 = sphi 0, %s90
    %s110 = sphi 0, %s110
    %s112 = sphi 0, %s110
    %s113 = sphi 0, %s112
    %s127 = sphi 0, %s113
    %s133 = sphi 0, %s135
    %s136 = sphi 0, %s133
    %s137 = sphi 0, %s136
    %s153 = sphi 0, %s137
  $region4: #{tpu_custom_call.1} parent=0 // loop_header_branch
    %13 = sbr.rel (%p11) target = $region8
  $region5: #{tpu_custom_call.1} parent=0 // loop_body
    %s15 = ssub.s32 %s10, 1
    %s16 = ssub.s32 %s10, 2
    %s23 = sadd.s32 1, %s18
    %p24 = scmp.ge.s32.totalorder %s23, 1
    %s25 = scalar_select %p24, 0, %s23
    %s26 = sadd.s32 1, %s17
    %s27 = scalar_select %p24, %s26, %s17
    %p28 = scmp.ge.s32.totalorder %s27, 2
    %s29 = scalar_select %p28, 0, %s27
    %s30 = ssub.s32 %s17, %s29
    %s31 = ssub.s32 %s18, %s25
    %s32 = sor.u32 %s30, %s31
    %p33 = scmp.eq.s32.totalorder %s32, 0
    %s35 = sadd.s32 %s34, 1
    %s36 = scalar_select %p33, %s34, %s35
    %p39 = pneg %p33
    %p40 = scmp.eq.s32.totalorder %s10, 1
    %p41 = por %p39, %p40
    %p42 = scmp.ne.s32.totalorder %s34, %s37
    %p43 = scmp.eq.s32.totalorder %s10, 0
    %p44 = por %p42, %p43
    %p45 = scmp.ne.s32.totalorder %s34, %s37
    %p46 = scmp.eq.s32.totalorder %s15, 1
    %p47 = por %p45, %p46
    %p48 = scmp.ne.s32.totalorder %s37, %s38
    %p49 = scmp.eq.s32.totalorder %s15, 0
    %p50 = por %p48, %p49
    %p51 = scmp.ne.s32.totalorder %s37, %s38
    %p52 = scmp.eq.s32.totalorder %s16, 1
    %p53 = por %p51, %p52
    %p55 = scmp.ne.s32.totalorder %s38, %s54
    %p56 = scmp.eq.s32.totalorder %s16, 0
    %p57 = por %p55, %p56
    %s58 = ssub.s32 %s18, %s25
    %p59 = scmp.eq.s32.totalorder %s58, 0
    %s61 = sadd.s32 %s60, 1
    %s62 = scalar_select %p59, %s60, %s61
    %p65 = pneg %p59
    %p66 = scmp.eq.s32.totalorder %s10, 1
    %p67 = por %p65, %p66
    %p68 = scmp.ne.s32.totalorder %s60, %s63
    %p69 = scmp.eq.s32.totalorder %s10, 0
    %p70 = por %p68, %p69
    %p71 = scmp.ne.s32.totalorder %s60, %s63
    %p72 = scmp.eq.s32.totalorder %s15, 1
    %p73 = por %p71, %p72
    %p74 = scmp.ne.s32.totalorder %s63, %s64
    %p75 = scmp.eq.s32.totalorder %s15, 0
    %p76 = por %p74, %p75
    %p77 = scmp.ne.s32.totalorder %s63, %s64
    %p78 = scmp.eq.s32.totalorder %s16, 1
    %p79 = por %p77, %p78
    %p81 = scmp.ne.s32.totalorder %s64, %s80
    %p82 = scmp.eq.s32.totalorder %s16, 0
    %p83 = por %p81, %p82
    %s84 = ssub.s32 %s18, %s25
    %p85 = scmp.eq.s32.totalorder %s84, 0
    %s87 = sadd.s32 %s86, 1
    %s88 = scalar_select %p85, %s86, %s87
    %p91 = pneg %p85
    %p92 = scmp.eq.s32.totalorder %s10, 1
    %p93 = por %p91, %p92
    %p94 = scmp.ne.s32.totalorder %s86, %s89
    %p95 = scmp.eq.s32.totalorder %s10, 0
    %p96 = por %p94, %p95
    %p97 = scmp.ne.s32.totalorder %s86, %s89
    %p98 = scmp.eq.s32.totalorder %s15, 1
    %p99 = por %p97, %p98
    %p100 = scmp.ne.s32.totalorder %s89, %s90
    %p101 = scmp.eq.s32.totalorder %s15, 0
    %p102 = por %p100, %p101
    %p103 = scmp.ne.s32.totalorder %s89, %s90
    %p104 = scmp.eq.s32.totalorder %s16, 1
    %p105 = por %p103, %p104
    %p107 = scmp.ne.s32.totalorder %s90, %s106
    %p108 = scmp.eq.s32.totalorder %s16, 0
    %p109 = por %p107, %p108
    %s111 = sadd.s32 %s110, 1
    %p114 = scmp.eq.s32.totalorder %s10, 1
    %p115 = scmp.ne.s32.totalorder %s110, %s112
    %p116 = scmp.eq.s32.totalorder %s10, 0
    %p117 = por %p115, %p116
    %p118 = scmp.ne.s32.totalorder %s110, %s112
    %p119 = scmp.eq.s32.totalorder %s15, 1
    %p120 = por %p118, %p119
    %p121 = scmp.ne.s32.totalorder %s112, %s113
    %p122 = scmp.eq.s32.totalorder %s15, 0
    %p123 = por %p121, %p122
    %p124 = scmp.ne.s32.totalorder %s112, %s113
    %p125 = scmp.eq.s32.totalorder %s16, 1
    %p126 = por %p124, %p125
    %p128 = scmp.ne.s32.totalorder %s113, %s127
    %p129 = scmp.eq.s32.totalorder %s16, 0
    %p130 = por %p128, %p129
    %s131 = ssub.s32 %s17, %s29
    %p132 = scmp.eq.s32.totalorder %s131, 0
    %s134 = sadd.s32 %s133, 1
    %s135 = scalar_select %p132, %s133, %s134
    %p138 = pneg %p132
    %p139 = scmp.eq.s32.totalorder %s10, 1
    %p140 = por %p138, %p139
    %p141 = scmp.ne.s32.totalorder %s133, %s136
    %p142 = scmp.eq.s32.totalorder %s10, 0
    %p143 = por %p141, %p142
    %p144 = scmp.ne.s32.totalorder %s133, %s136
    %p145 = scmp.eq.s32.totalorder %s15, 1
    %p146 = por %p144, %p145
    %p147 = scmp.ne.s32.totalorder %s136, %s137
    %p148 = scmp.eq.s32.totalorder %s15, 0
    %p149 = por %p147, %p148
    %p150 = scmp.ne.s32.totalorder %s136, %s137
    %p151 = scmp.eq.s32.totalorder %s16, 1
    %p152 = por %p150, %p151
    %p154 = scmp.ne.s32.totalorder %s137, %s153
    %p155 = scmp.eq.s32.totalorder %s16, 0
    %p156 = por %p154, %p155
    %p157 = scmp.le.s32.totalorder 1, %s10
    %p158 = scmp.lt.s32.totalorder %s10, 3
    %p159 = pnand %p157, %p158
    %p160 = pneg %p159
    // Predicated region
    $region9: #{tpu_custom_call.1} parent=5 // pred_check
      _
    $region10: #{tpu_custom_call.1} parent=5 // pred_check_branch
      %162 = sbr.rel (%p159) target = $region12
    $region11: #{tpu_custom_call.1} parent=5 // pred_region
      %s163 = ssub.s32 %s10, 1
      // Predicated region
      $region13: #{tpu_custom_call.1} parent=11 // pred_check
        %p164 = pneg %p76
      $region14: #{tpu_custom_call.1} parent=11 // pred_check_branch
        %166 = sbr.rel (%p164) target = $region16
      $region15: #{tpu_custom_call.1} parent=11 // pred_region
        %p167 = scmp.lt.s32.totalorder %s20, 0
        %s168 = scalar_select %p167, %s20, 0
        %s169 = smul.addr %s168, 8
        %s170 = scalar_lea.vmem %s1, %s169
      $region16: #{tpu_custom_call.1} parent=11 // pred_fallthru
        _
      // Predicated region
      $region17: #{tpu_custom_call.1} parent=11 // pred_check
        %p171 = pneg %p102
      $region18: #{tpu_custom_call.1} parent=11 // pred_check_branch
        %173 = sbr.rel (%p171) target = $region20
      $region19: #{tpu_custom_call.1} parent=11 // pred_region
        %p174 = scmp.lt.s32.totalorder %s20, 0
        %s175 = scalar_select %p174, %s20, 0
        %s176 = smul.addr %s175, 8
        %s177 = scalar_lea.vmem %s2, %s176
      $region20: #{tpu_custom_call.1} parent=11 // pred_fallthru
        _
      // Predicated region
      $region21: #{tpu_custom_call.1} parent=11 // pred_check
        %p178 = pneg %p123
      $region22: #{tpu_custom_call.1} parent=11 // pred_check_branch
        %180 = sbr.rel (%p178) target = $region24
      $region23: #{tpu_custom_call.1} parent=11 // pred_region
        _
      $region24: #{tpu_custom_call.1} parent=11 // pred_fallthru
        _
    $region12: #{tpu_custom_call.1} parent=5 // pred_fallthru
      _
    %p181 = scmp.lt.s32.totalorder %s10, 2
    // Predicated region
    $region25: #{tpu_custom_call.1} parent=5 // pred_check
      %p182 = pneg %p181
    $region26: #{tpu_custom_call.1} parent=5 // pred_check_branch
      %184 = sbr.rel (%p182) target = $region28
    $region27: #{tpu_custom_call.1} parent=5 // pred_region
      // Predicated region
      $region29: #{tpu_custom_call.1} parent=27 // pred_check
        %p185 = pneg %p44
      $region30: #{tpu_custom_call.1} parent=27 // pred_check_branch
        %187 = sbr.rel (%p185) target = $region32
      $region31: #{tpu_custom_call.1} parent=27 // pred_region
        %p188 = scmp.lt.s32.totalorder %s17, 1
        %s189 = scalar_select %p188, %s17, 1
        %p190 = scmp.lt.s32.totalorder %s18, 0
        %s191 = scalar_select %p190, %s18, 0
        %s192 = smul.addr %s191, 4
        %s193 = smul.addr %s189, 4
        %s194 = sadd.s32 %s192, %s193
        %s195 = smul.addr %s194, 4
        %s196 = scalar_lea.vmem %s0, %s195
      $region32: #{tpu_custom_call.1} parent=27 // pred_fallthru
        _
    $region28: #{tpu_custom_call.1} parent=5 // pred_fallthru
      _
    %p197 = scmp.le.s32.totalorder 1, %s10
    %p198 = scmp.lt.s32.totalorder %s10, 3
    %p199 = pnand %p197, %p198
    %p200 = pneg %p199
    // Predicated region
    $region33: #{tpu_custom_call.1} parent=5 // pred_check
      _
    $region34: #{tpu_custom_call.1} parent=5 // pred_check_branch
      %202 = sbr.rel (%p199) target = $region36
    $region35: #{tpu_custom_call.1} parent=5 // pred_region
      %s203 = ssub.s32 %s10, 1
      %p204 = scmp.lt.s32.totalorder %s19, 1
      %s205 = scalar_select %p204, %s19, 1
      %p206 = scmp.lt.s32.totalorder %s20, 0
      %s207 = scalar_select %p206, %s20, 0
      %s208 = smul.addr %s207, 4
      %s209 = smul.addr %s205, 4
      %s210 = sadd.s32 %s208, %s209
      %s211 = smul.addr %s210, 4
      %s212 = scalar_lea.vmem %s0, %s211
      %p213 = pneg %p50
      %p214 = pneg %p47
      %p215 = scmp.lt.s32.totalorder %s20, 0
      %s216 = scalar_select %p215, %s20, 0
      %s217 = smul.addr %s216, 8
      %s218 = scalar_lea.vmem %s1, %s217
      %p219 = pneg %p76
      %p220 = pneg %p73
      %p221 = scmp.lt.s32.totalorder %s20, 0
      %s222 = scalar_select %p221, %s20, 0
      %s223 = smul.addr %s222, 8
      %s224 = scalar_lea.vmem %s2, %s223
      %p225 = pneg %p102
      %p226 = pneg %p99
      %p227 = pneg %p123
      %p228 = pneg %p120
      %p229 = pneg %p149
      %p230 = pneg %p146
      %p231 = scmp.lt.s32.totalorder %s19, 1
      %s232 = scalar_select %p231, %s19, 1
      %s233 = smul.addr %s232, 3
      %s234 = smul.addr %s233, 8
      %s235 = scalar_lea.vmem %s4, %s234
      %p236 = scmp.lt.s32.totalorder %s19, 1
      %s237 = scalar_select %p236, %s19, 1
      %p238 = scmp.lt.s32.totalorder %s20, 0
      %s239 = scalar_select %p238, %s20, 0
      %s240 = smul.addr %s239, 4
      %s241 = smul.addr %s237, 4
      %s242 = sadd.s32 %s240, %s241
      %s243 = smul.addr %s242, 4
      %s244 = scalar_lea.vmem %s0, %s243
      %p245 = scmp.lt.s32.totalorder %s20, 0
      %s246 = scalar_select %p245, %s20, 0
      %s247 = smul.addr %s246, 8
      %s248 = scalar_lea.vmem %s1, %s247
      %p249 = scmp.lt.s32.totalorder %s20, 0
      %s250 = scalar_select %p249, %s20, 0
      %s251 = smul.addr %s250, 8
      %s252 = scalar_lea.vmem %s2, %s251
      %p253 = scmp.lt.s32.totalorder %s19, 1
      %s254 = scalar_select %p253, %s19, 1
      %s255 = smul.addr %s254, 3
      %s256 = smul.addr %s255, 8
      %s257 = scalar_lea.vmem %s4, %s256
      %p258 = scmp.eq.s32.totalorder %s20, 0
      // Predicated region
      $region37: #{tpu_custom_call.1} parent=35 // pred_check
        %p259 = pneg %p258
      $region38: #{tpu_custom_call.1} parent=35 // pred_check_branch
        %261 = sbr.rel (%p259) target = $region40
      $region39: #{tpu_custom_call.1} parent=35 // pred_region
        %262 = vst [vmem:[%s257] sm:$0x1f] 0.0
        %263 = vst [vmem:[%s257 + $0x8] sm:$0x1f] 0.0
        %vm264 = vcmask 733184
        %265 = vst.msk [vmem:[%s257 + $0x10] sm:$0x1f] %vm264, 0.0
      $region40: #{tpu_custom_call.1} parent=35 // pred_fallthru
        _
      %v266 = vld [vmem:[%s244] sm:$0xff]
      %v267 = vld [vmem:[%s244 + $0x8] sm:$0xff]
      %v268 = vld [vmem:[%s252] sm:$0x1f]
      %v271 = vcombine.high %v266, %v266
      %v272 = vcombine.high %v267, %v267
      %vm273 = vcmask 31744
      %v275 = vsel %vm273, %v268, 0
      %vm277 = vcmask 1043456
      %v278 = vsel %vm277, %v266, 0
      %v280 = vsel %vm277, %v271, 0
      %v282 = vsel %vm277, %v267, 0
      %v284 = vsel %vm277, %v272, 0
      %286 = vmatprep.subr.mxu0 0.0
      %287 = vmatpush1.msra.mxu0 0.0
      %288 = vmatprep.subr.mxu0 0.0
      %289 = vmatpush1.msra.mxu0 0.0
      %290 = vmatprep.subr.mxu0 0.0
      %291 = vmatpush1.msra.mxu0 0.0
      %292 = vmatprep.subr.mxu0 0.0
      %293 = vmatpush1.msra.mxu0 0.0
      %294 = vmatprep.subr.mxu0 0.0
      %295 = vmatpush1.msra.mxu0 0.0
      %296 = vmatprep.subr.mxu0 0.0
      %297 = vmatpush1.msra.mxu0 0.0
      %298 = vmatprep.subr.mxu0 0.0
      %299 = vmatpush1.msra.mxu0 0.0
      %300 = vmatprep.subr.mxu0 0.0
      %301 = vmatpush1.msra.mxu0 0.0
      %302 = vmatprep.subr.mxu0 0.0
      %303 = vmatpush1.msra.mxu0 0.0
      %304 = vmatprep.subr.mxu0 0.0
      %305 = vmatpush1.msra.mxu0 0.0
      %306 = vmatprep.subr.mxu0 0.0
      %307 = vmatpush1.msra.mxu0 0.0
      %308 = vmatprep.subr.mxu0 0.0
      %309 = vmatpush1.msra.mxu0 0.0
      %310 = vmatprep.subr.mxu0 0.0
      %311 = vmatpush1.msra.mxu0 0.0
      %312 = vmatprep.subr.mxu0 0.0
      %313 = vmatpush1.msra.mxu0 0.0
      %314 = vmatprep.subr.mxu0 0.0
      %315 = vmatpush1.msra.mxu0 0.0
      %316 = vmatprep.subr.mxu0 %v280
      %317 = vmatpush1.msra.mxu0 %v278
      %318 = vmatprep.subr.mxu0 0.0
      %319 = vmatpush2.msra.mxu0 0.0
      %320 = vmatprep.subr.mxu0 0.0
      %321 = vmatpush2.msra.mxu0 0.0
      %322 = vmatprep.subr.mxu0 0.0
      %323 = vmatpush2.msra.mxu0 0.0
      %324 = vmatprep.subr.mxu0 0.0
      %325 = vmatpush2.msra.mxu0 0.0
      %326 = vmatprep.subr.mxu0 0.0
      %327 = vmatpush2.msra.mxu0 0.0
      %328 = vmatprep.subr.mxu0 0.0
      %329 = vmatpush2.msra.mxu0 0.0
      %330 = vmatprep.subr.mxu0 0.0
      %331 = vmatpush2.msra.mxu0 0.0
      %332 = vmatprep.subr.mxu0 0.0
      %333 = vmatpush2.msra.mxu0 0.0
      %334 = vmatprep.subr.mxu0 0.0
      %335 = vmatpush2.msra.mxu0 0.0
      %336 = vmatprep.subr.mxu0 0.0
      %337 = vmatpush2.msra.mxu0 0.0
      %338 = vmatprep.subr.mxu0 0.0
      %339 = vmatpush2.msra.mxu0 0.0
      %340 = vmatprep.subr.mxu0 0.0
      %341 = vmatpush2.msra.mxu0 0.0
      %342 = vmatprep.subr.mxu0 0.0
      %343 = vmatpush2.msra.mxu0 0.0
      %344 = vmatprep.subr.mxu0 0.0
      %345 = vmatpush2.msra.mxu0 0.0
      %346 = vmatprep.subr.mxu0 0.0
      %347 = vmatpush2.msra.mxu0 0.0
      %348 = vmatprep.subr.mxu0 0.0
      %349 = vmatpush2.msra.mxu0 0.0
      %350 = vmatprep.mubr.f32.mxu0 0.0
      %351 = vmatmul.mubr.f32.gmra.mxu0 %v275
      %v352 = vpop.f32.mrf.mxu0
      %v353 = vadd.f32 0.0, %v352
      %v354 = vpop.f32.mrf.mxu0
      %v355 = vadd.f32 0.0, %v354
      %356 = vdwg.mxu0
      %357 = vmatprep.subr.mxu0 0.0
      %358 = vmatpush1.msra.mxu0 0.0
      %359 = vmatprep.subr.mxu0 0.0
      %360 = vmatpush1.msra.mxu0 0.0
      %361 = vmatprep.subr.mxu0 0.0
      %362 = vmatpush1.msra.mxu0 0.0
      %363 = vmatprep.subr.mxu0 0.0
      %364 = vmatpush1.msra.mxu0 0.0
      %365 = vmatprep.subr.mxu0 0.0
      %366 = vmatpush1.msra.mxu0 0.0
      %367 = vmatprep.subr.mxu0 0.0
      %368 = vmatpush1.msra.mxu0 0.0
      %369 = vmatprep.subr.mxu0 0.0
      %370 = vmatpush1.msra.mxu0 0.0
      %371 = vmatprep.subr.mxu0 0.0
      %372 = vmatpush1.msra.mxu0 0.0
      %373 = vmatprep.subr.mxu0 0.0
      %374 = vmatpush1.msra.mxu0 0.0
      %375 = vmatprep.subr.mxu0 0.0
      %376 = vmatpush1.msra.mxu0 0.0
      %377 = vmatprep.subr.mxu0 0.0
      %378 = vmatpush1.msra.mxu0 0.0
      %379 = vmatprep.subr.mxu0 0.0
      %380 = vmatpush1.msra.mxu0 0.0
      %381 = vmatprep.subr.mxu0 0.0
      %382 = vmatpush1.msra.mxu0 0.0
      %383 = vmatprep.subr.mxu0 0.0
      %384 = vmatpush1.msra.mxu0 0.0
      %385 = vmatprep.subr.mxu0 0.0
      %386 = vmatpush1.msra.mxu0 0.0
      %387 = vmatprep.subr.mxu0 %v284
      %388 = vmatpush1.msra.mxu0 %v282
      %389 = vmatprep.subr.mxu0 0.0
      %390 = vmatpush2.msra.mxu0 0.0
      %391 = vmatprep.subr.mxu0 0.0
      %392 = vmatpush2.msra.mxu0 0.0
      %393 = vmatprep.subr.mxu0 0.0
      %394 = vmatpush2.msra.mxu0 0.0
      %395 = vmatprep.subr.mxu0 0.0
      %396 = vmatpush2.msra.mxu0 0.0
      %397 = vmatprep.subr.mxu0 0.0
      %398 = vmatpush2.msra.mxu0 0.0
      %399 = vmatprep.subr.mxu0 0.0
      %400 = vmatpush2.msra.mxu0 0.0
      %401 = vmatprep.subr.mxu0 0.0
      %402 = vmatpush2.msra.mxu0 0.0
      %403 = vmatprep.subr.mxu0 0.0
      %404 = vmatpush2.msra.mxu0 0.0
      %405 = vmatprep.subr.mxu0 0.0
      %406 = vmatpush2.msra.mxu0 0.0
      %407 = vmatprep.subr.mxu0 0.0
      %408 = vmatpush2.msra.mxu0 0.0
      %409 = vmatprep.subr.mxu0 0.0
      %410 = vmatpush2.msra.mxu0 0.0
      %411 = vmatprep.subr.mxu0 0.0
      %412 = vmatpush2.msra.mxu0 0.0
      %413 = vmatprep.subr.mxu0 0.0
      %414 = vmatpush2.msra.mxu0 0.0
      %415 = vmatprep.subr.mxu0 0.0
      %416 = vmatpush2.msra.mxu0 0.0
      %417 = vmatprep.subr.mxu0 0.0
      %418 = vmatpush2.msra.mxu0 0.0
      %419 = vmatprep.subr.mxu0 0.0
      %420 = vmatpush2.msra.mxu0 0.0
      %421 = vmatprep.mubr.f32.mxu0 0.0
      %422 = vmatmul.mubr.f32.gmra.mxu0 %v275
      %v423 = vpop.f32.mrf.mxu0
      %v424 = vadd.f32 0.0, %v423
      %v425 = vpop.f32.mrf.mxu0
      %v426 = vadd.f32 0.0, %v425
      %427 = vdwg.mxu0
      %428 = vst [vmem:[#allocation2] sm:$0x1f] %v353
      %429 = vst [vmem:[#allocation2 + $0x8] sm:$0x1f] %v355
      %430 = vst [vmem:[#allocation2 + $0x10] sm:$0x1f] %v424
      %vm431 = vcmask 815104
      %432 = vst.msk [vmem:[#allocation2 + $0x18] sm:$0x1f] %vm431, %v426
      %v433 = vld [vmem:[%s257] sm:$0x1f]
      %v434 = vld [vmem:[%s257 + $0x8] sm:$0x1f]
      %v435 = vld [vmem:[%s257 + $0x10] sm:$0x1f]
      %v436 = vld [vmem:[#allocation2] sm:$0x1f]
      %v437 = vld [vmem:[#allocation2 + $0x8] sm:$0x1f]
      %v438 = vld [vmem:[#allocation2 + $0x10] sm:$0x1f]
      %v439 = vld [vmem:[#allocation2 + $0x18] sm:$0x1f]
      %444 = vrot.lane.b32.xlu0 %v436, 59
      %v445 = vpop.permute.xlu0 %444
      %446 = vrot.lane.b32.xlu0 %v437, 59
      %v447 = vpop.permute.xlu0 %446
      %448 = vrot.lane.b32.xlu0 %v438, 59
      %v449 = vpop.permute.xlu0 %448
      %450 = vrot.lane.b32.xlu0 %v439, 59
      %v451 = vpop.permute.xlu0 %450
      %vm452 = vcmask 482304
      %v453 = vsel %vm452, %v445, %v447
      %v454 = vsel %vm452, %v447, %v449
      %v455 = vsel %vm452, %v449, %v451
      %v459 = vadd.f32 %v433, %v453
      %v460 = vadd.f32 %v434, %v454
      %v461 = vadd.f32 %v435, %v455
      %462 = vst [vmem:[%s257] sm:$0x1f] %v459
      %463 = vst [vmem:[%s257 + $0x8] sm:$0x1f] %v460
      %vm464 = vcmask 733184
      %465 = vst.msk [vmem:[%s257 + $0x10] sm:$0x1f] %vm464, %v461
      %v466 = vld [vmem:[%s248] sm:$0xff]
      %v467 = vld [vmem:[%s248 + $0x8] sm:$0xff]
      %v468 = vld [vmem:[%s248 + $0x10] sm:$0xff]
      %v469 = vld [vmem:[%s248 + $0x18] sm:$0xff]
      %v470 = vld [vmem:[%s248 + $0x20] sm:$0xff]
      %v472 = vsel %vm273, %v466, 0
      %v475 = vsel %vm273, %v467, 0
      %v478 = vsel %vm273, %v468, 0
      %v481 = vsel %vm273, %v469, 0
      %v484 = vsel %vm273, %v470, 0
      %486 = vmatprep.subr.mxu0 0.0
      %487 = vmatpush1.msra.mxu0 0.0
      %488 = vmatprep.subr.mxu0 0.0
      %489 = vmatpush1.msra.mxu0 0.0
      %490 = vmatprep.subr.mxu0 0.0
      %491 = vmatpush1.msra.mxu0 0.0
      %492 = vmatprep.subr.mxu0 0.0
      %493 = vmatpush1.msra.mxu0 0.0
      %494 = vmatprep.subr.mxu0 0.0
      %495 = vmatpush1.msra.mxu0 0.0
      %496 = vmatprep.subr.mxu0 0.0
      %497 = vmatpush1.msra.mxu0 0.0
      %498 = vmatprep.subr.mxu0 0.0
      %499 = vmatpush1.msra.mxu0 0.0
      %500 = vmatprep.subr.mxu0 0.0
      %501 = vmatpush1.msra.mxu0 0.0
      %502 = vmatprep.subr.mxu0 0.0
      %503 = vmatpush1.msra.mxu0 0.0
      %504 = vmatprep.subr.mxu0 0.0
      %505 = vmatpush1.msra.mxu0 0.0
      %506 = vmatprep.subr.mxu0 0.0
      %507 = vmatpush1.msra.mxu0 0.0
      %508 = vmatprep.subr.mxu0 0.0
      %509 = vmatpush1.msra.mxu0 0.0
      %510 = vmatprep.subr.mxu0 0.0
      %511 = vmatpush1.msra.mxu0 0.0
      %512 = vmatprep.subr.mxu0 0.0
      %513 = vmatpush1.msra.mxu0 0.0
      %514 = vmatprep.subr.mxu0 0.0
      %515 = vmatpush1.msra.mxu0 0.0
      %516 = vmatprep.subr.mxu0 %v280
      %517 = vmatpush1.msra.mxu0 %v278
      %518 = vmatprep.subr.mxu0 0.0
      %519 = vmatpush2.msra.mxu0 0.0
      %520 = vmatprep.subr.mxu0 0.0
      %521 = vmatpush2.msra.mxu0 0.0
      %522 = vmatprep.subr.mxu0 0.0
      %523 = vmatpush2.msra.mxu0 0.0
      %524 = vmatprep.subr.mxu0 0.0
      %525 = vmatpush2.msra.mxu0 0.0
      %526 = vmatprep.subr.mxu0 0.0
      %527 = vmatpush2.msra.mxu0 0.0
      %528 = vmatprep.subr.mxu0 0.0
      %529 = vmatpush2.msra.mxu0 0.0
      %530 = vmatprep.subr.mxu0 0.0
      %531 = vmatpush2.msra.mxu0 0.0
      %532 = vmatprep.subr.mxu0 0.0
      %533 = vmatpush2.msra.mxu0 0.0
      %534 = vmatprep.subr.mxu0 0.0
      %535 = vmatpush2.msra.mxu0 0.0
      %536 = vmatprep.subr.mxu0 0.0
      %537 = vmatpush2.msra.mxu0 0.0
      %538 = vmatprep.subr.mxu0 0.0
      %539 = vmatpush2.msra.mxu0 0.0
      %540 = vmatprep.subr.mxu0 0.0
      %541 = vmatpush2.msra.mxu0 0.0
      %542 = vmatprep.subr.mxu0 0.0
      %543 = vmatpush2.msra.mxu0 0.0
      %544 = vmatprep.subr.mxu0 0.0
      %545 = vmatpush2.msra.mxu0 0.0
      %546 = vmatprep.subr.mxu0 0.0
      %547 = vmatpush2.msra.mxu0 0.0
      %548 = vmatprep.subr.mxu0 0.0
      %549 = vmatpush2.msra.mxu0 0.0
      %550 = vmatprep.mubr.f32.mxu0 0.0
      %551 = vmatmul.mubr.f32.gmra.mxu0 %v472
      %v552 = vpop.f32.mrf.mxu0
      %v553 = vadd.f32 0.0, %v552
      %v554 = vpop.f32.mrf.mxu0
      %v555 = vadd.f32 0.0, %v554
      %556 = vmatprep.mubr.f32.mxu0 0.0
      %557 = vmatmul.mubr.f32.gmra.mxu0 %v475
      %v558 = vpop.f32.mrf.mxu0
      %v559 = vadd.f32 0.0, %v558
      %v560 = vpop.f32.mrf.mxu0
      %v561 = vadd.f32 0.0, %v560
      %562 = vmatprep.mubr.f32.mxu0 0.0
      %563 = vmatmul.mubr.f32.gmra.mxu0 %v478
      %v564 = vpop.f32.mrf.mxu0
      %v565 = vadd.f32 0.0, %v564
      %v566 = vpop.f32.mrf.mxu0
      %v567 = vadd.f32 0.0, %v566
      %568 = vmatprep.mubr.f32.mxu0 0.0
      %569 = vmatmul.mubr.f32.gmra.mxu0 %v481
      %v570 = vpop.f32.mrf.mxu0
      %v571 = vadd.f32 0.0, %v570
      %v572 = vpop.f32.mrf.mxu0
      %v573 = vadd.f32 0.0, %v572
      %574 = vmatprep.mubr.f32.mxu0 0.0
      %575 = vmatmul.mubr.f32.gmra.mxu0 %v484
      %v576 = vpop.f32.mrf.mxu0
      %v577 = vadd.f32 0.0, %v576
      %v578 = vpop.f32.mrf.mxu0
      %v579 = vadd.f32 0.0, %v578
      %580 = vdwg.mxu0
      %581 = vmatprep.subr.mxu0 0.0
      %582 = vmatpush1.msra.mxu0 0.0
      %583 = vmatprep.subr.mxu0 0.0
      %584 = vmatpush1.msra.mxu0 0.0
      %585 = vmatprep.subr.mxu0 0.0
      %586 = vmatpush1.msra.mxu0 0.0
      %587 = vmatprep.subr.mxu0 0.0
      %588 = vmatpush1.msra.mxu0 0.0
      %589 = vmatprep.subr.mxu0 0.0
      %590 = vmatpush1.msra.mxu0 0.0
      %591 = vmatprep.subr.mxu0 0.0
      %592 = vmatpush1.msra.mxu0 0.0
      %593 = vmatprep.subr.mxu0 0.0
      %594 = vmatpush1.msra.mxu0 0.0
      %595 = vmatprep.subr.mxu0 0.0
      %596 = vmatpush1.msra.mxu0 0.0
      %597 = vmatprep.subr.mxu0 0.0
      %598 = vmatpush1.msra.mxu0 0.0
      %599 = vmatprep.subr.mxu0 0.0
      %600 = vmatpush1.msra.mxu0 0.0
      %601 = vmatprep.subr.mxu0 0.0
      %602 = vmatpush1.msra.mxu0 0.0
      %603 = vmatprep.subr.mxu0 0.0
      %604 = vmatpush1.msra.mxu0 0.0
      %605 = vmatprep.subr.mxu0 0.0
      %606 = vmatpush1.msra.mxu0 0.0
      %607 = vmatprep.subr.mxu0 0.0
      %608 = vmatpush1.msra.mxu0 0.0
      %609 = vmatprep.subr.mxu0 0.0
      %610 = vmatpush1.msra.mxu0 0.0
      %611 = vmatprep.subr.mxu0 %v284
      %612 = vmatpush1.msra.mxu0 %v282
      %613 = vmatprep.subr.mxu0 0.0
      %614 = vmatpush2.msra.mxu0 0.0
      %615 = vmatprep.subr.mxu0 0.0
      %616 = vmatpush2.msra.mxu0 0.0
      %617 = vmatprep.subr.mxu0 0.0
      %618 = vmatpush2.msra.mxu0 0.0
      %619 = vmatprep.subr.mxu0 0.0
      %620 = vmatpush2.msra.mxu0 0.0
      %621 = vmatprep.subr.mxu0 0.0
      %622 = vmatpush2.msra.mxu0 0.0
      %623 = vmatprep.subr.mxu0 0.0
      %624 = vmatpush2.msra.mxu0 0.0
      %625 = vmatprep.subr.mxu0 0.0
      %626 = vmatpush2.msra.mxu0 0.0
      %627 = vmatprep.subr.mxu0 0.0
      %628 = vmatpush2.msra.mxu0 0.0
      %629 = vmatprep.subr.mxu0 0.0
      %630 = vmatpush2.msra.mxu0 0.0
      %631 = vmatprep.subr.mxu0 0.0
      %632 = vmatpush2.msra.mxu0 0.0
      %633 = vmatprep.subr.mxu0 0.0
      %634 = vmatpush2.msra.mxu0 0.0
      %635 = vmatprep.subr.mxu0 0.0
      %636 = vmatpush2.msra.mxu0 0.0
      %637 = vmatprep.subr.mxu0 0.0
      %638 = vmatpush2.msra.mxu0 0.0
      %639 = vmatprep.subr.mxu0 0.0
      %640 = vmatpush2.msra.mxu0 0.0
      %641 = vmatprep.subr.mxu0 0.0
      %642 = vmatpush2.msra.mxu0 0.0
      %643 = vmatprep.subr.mxu0 0.0
      %644 = vmatpush2.msra.mxu0 0.0
      %645 = vmatprep.mubr.f32.mxu0 0.0
      %646 = vmatmul.mubr.f32.gmra.mxu0 %v472
      %v647 = vpop.f32.mrf.mxu0
      %v648 = vadd.f32 0.0, %v647
      %v649 = vpop.f32.mrf.mxu0
      %v650 = vadd.f32 0.0, %v649
      %651 = vmatprep.mubr.f32.mxu0 0.0
      %652 = vmatmul.mubr.f32.gmra.mxu0 %v475
      %v653 = vpop.f32.mrf.mxu0
      %v654 = vadd.f32 0.0, %v653
      %v655 = vpop.f32.mrf.mxu0
      %v656 = vadd.f32 0.0, %v655
      %657 = vmatprep.mubr.f32.mxu0 0.0
      %658 = vmatmul.mubr.f32.gmra.mxu0 %v478
      %v659 = vpop.f32.mrf.mxu0
      %v660 = vadd.f32 0.0, %v659
      %v661 = vpop.f32.mrf.mxu0
      %v662 = vadd.f32 0.0, %v661
      %663 = vmatprep.mubr.f32.mxu0 0.0
      %664 = vmatmul.mubr.f32.gmra.mxu0 %v481
      %v665 = vpop.f32.mrf.mxu0
      %v666 = vadd.f32 0.0, %v665
      %v667 = vpop.f32.mrf.mxu0
      %v668 = vadd.f32 0.0, %v667
      %669 = vmatprep.mubr.f32.mxu0 0.0
      %670 = vmatmul.mubr.f32.gmra.mxu0 %v484
      %v671 = vpop.f32.mrf.mxu0
      %v672 = vadd.f32 0.0, %v671
      %v673 = vpop.f32.mrf.mxu0
      %v674 = vadd.f32 0.0, %v673
      %675 = vdwg.mxu0
      %676 = vst [vmem:[#allocation2] sm:$0xff] %v553
      %677 = vst [vmem:[#allocation2 + $0x8] sm:$0xff] %v555
      %678 = vst [vmem:[#allocation2 + $0x10] sm:$0xff] %v648
      %vm679 = vcmask 818176
      %680 = vst.msk [vmem:[#allocation2 + $0x18] sm:$0xff] %vm679, %v650
      %681 = vst [vmem:[#allocation2 + $0x20] sm:$0xff] %v559
      %682 = vst [vmem:[#allocation2 + $0x28] sm:$0xff] %v561
      %683 = vst [vmem:[#allocation2 + $0x30] sm:$0xff] %v654
      %684 = vst.msk [vmem:[#allocation2 + $0x38] sm:$0xff] %vm679, %v656
      %685 = vst [vmem:[#allocation2 + $0x40] sm:$0xff] %v565
      %686 = vst [vmem:[#allocation2 + $0x48] sm:$0xff] %v567
      %687 = vst [vmem:[#allocation2 + $0x50] sm:$0xff] %v660
      %688 = vst.msk [vmem:[#allocation2 + $0x58] sm:$0xff] %vm679, %v662
      %689 = vst [vmem:[#allocation2 + $0x60] sm:$0xff] %v571
      %690 = vst [vmem:[#allocation2 + $0x68] sm:$0xff] %v573
      %691 = vst [vmem:[#allocation2 + $0x70] sm:$0xff] %v666
      %692 = vst.msk [vmem:[#allocation2 + $0x78] sm:$0xff] %vm679, %v668
      %693 = vst [vmem:[#allocation2 + $0x80] sm:$0xff] %v577
      %694 = vst [vmem:[#allocation2 + $0x88] sm:$0xff] %v579
      %695 = vst [vmem:[#allocation2 + $0x90] sm:$0xff] %v672
      %696 = vst.msk [vmem:[#allocation2 + $0x98] sm:$0xff] %vm679, %v674
      %v697 = vld [vmem:[%s257] sm:$0x1f]
      %v698 = vld [vmem:[%s257 + $0x8] sm:$0x1f]
      %v699 = vld [vmem:[%s257 + $0x10] sm:$0x1f]
      %v700 = vld [vmem:[#allocation2] sm:$0x1f]
      %v701 = vld [vmem:[#allocation2 + $0x8] sm:$0x1f]
      %v702 = vld [vmem:[#allocation2 + $0x10] sm:$0x1f]
      %v703 = vld [vmem:[#allocation2 + $0x18] sm:$0x1f]
      %708 = vrot.lane.b32.xlu0 %v700, 82
      %v709 = vpop.permute.xlu0 %708
      %710 = vrot.lane.b32.xlu0 %v701, 82
      %v711 = vpop.permute.xlu0 %710
      %712 = vrot.lane.b32.xlu0 %v702, 82
      %v713 = vpop.permute.xlu0 %712
      %714 = vrot.lane.b32.xlu0 %v703, 82
      %v715 = vpop.permute.xlu0 %714
      %vm716 = vcmask 670720
      %v717 = vsel %vm716, %v709, %v711
      %v718 = vsel %vm716, %v711, %v713
      %v719 = vsel %vm716, %v713, %v715
      %v723 = vadd.f32 %v697, %v717
      %v724 = vadd.f32 %v698, %v718
      %v725 = vadd.f32 %v699, %v719
      %726 = vst [vmem:[%s257] sm:$0x1f] %v723
      %727 = vst [vmem:[%s257 + $0x8] sm:$0x1f] %v724
      %728 = vst.msk [vmem:[%s257 + $0x10] sm:$0x1f] %vm464, %v725
      %v729 = vld [vmem:[%s257] sm:$0x1f]
      %v730 = vld [vmem:[%s257 + $0x8] sm:$0x1f]
      %v731 = vld [vmem:[%s257 + $0x10] sm:$0x1f]
      %v732 = vld [vmem:[#allocation2] sm:$0xe0]
      %v733 = vld [vmem:[#allocation2 + $0x8] sm:$0xe0]
      %v734 = vld [vmem:[#allocation2 + $0x10] sm:$0xe0]
      %v735 = vld [vmem:[#allocation2 + $0x18] sm:$0xe0]
      %v736 = vld [vmem:[#allocation2 + $0x20] sm:$0x3]
      %v737 = vld [vmem:[#allocation2 + $0x28] sm:$0x3]
      %v738 = vld [vmem:[#allocation2 + $0x30] sm:$0x3]
      %v739 = vld [vmem:[#allocation2 + $0x38] sm:$0x3]
      %vm748 = vcmask 1042432
      %v749 = vrot.slane %v732, 5
      %v750 = vrot.slane %v736, 5
      %v751 = vsel %vm748, %v749, %v750
      %v752 = vrot.slane %v733, 5
      %v753 = vrot.slane %v737, 5
      %v754 = vsel %vm748, %v752, %v753
      %v755 = vrot.slane %v734, 5
      %v756 = vrot.slane %v738, 5
      %v757 = vsel %vm748, %v755, %v756
      %v758 = vrot.slane %v735, 5
      %v759 = vrot.slane %v739, 5
      %v760 = vsel %vm748, %v758, %v759
      %761 = vrot.lane.b32.xlu0 %v751, 81
      %v762 = vpop.permute.xlu0 %761
      %763 = vrot.lane.b32.xlu0 %v754, 81
      %v764 = vpop.permute.xlu0 %763
      %765 = vrot.lane.b32.xlu0 %v757, 81
      %v766 = vpop.permute.xlu0 %765
      %767 = vrot.lane.b32.xlu0 %v760, 81
      %v768 = vpop.permute.xlu0 %767
      %vm769 = vcmask 662528
      %v770 = vsel %vm769, %v762, %v764
      %v771 = vsel %vm769, %v764, %v766
      %v772 = vsel %vm769, %v766, %v768
      %v776 = vadd.f32 %v729, %v770
      %v777 = vadd.f32 %v730, %v771
      %v778 = vadd.f32 %v731, %v772
      %779 = vst [vmem:[%s257] sm:$0x1f] %v776
      %780 = vst [vmem:[%s257 + $0x8] sm:$0x1f] %v777
      %781 = vst.msk [vmem:[%s257 + $0x10] sm:$0x1f] %vm464, %v778
      %v782 = vld [vmem:[%s257] sm:$0x1f]
      %v783 = vld [vmem:[%s257 + $0x8] sm:$0x1f]
      %v784 = vld [vmem:[%s257 + $0x10] sm:$0x1f]
      %v785 = vld [vmem:[#allocation2 + $0x20] sm:$0x7c]
      %v786 = vld [vmem:[#allocation2 + $0x28] sm:$0x7c]
      %v787 = vld [vmem:[#allocation2 + $0x30] sm:$0x7c]
      %v788 = vld [vmem:[#allocation2 + $0x38] sm:$0x7c]
      %v793 = vrot.slane %v785, 2
      %v794 = vrot.slane %v786, 2
      %v795 = vrot.slane %v787, 2
      %v796 = vrot.slane %v788, 2
      %797 = vrot.lane.b32.xlu0 %v793, 80
      %v798 = vpop.permute.xlu0 %797
      %799 = vrot.lane.b32.xlu0 %v794, 80
      %v800 = vpop.permute.xlu0 %799
      %801 = vrot.lane.b32.xlu0 %v795, 80
      %v802 = vpop.permute.xlu0 %801
      %803 = vrot.lane.b32.xlu0 %v796, 80
      %v804 = vpop.permute.xlu0 %803
      %vm805 = vcmask 654336
      %v806 = vsel %vm805, %v798, %v800
      %v807 = vsel %vm805, %v800, %v802
      %v808 = vsel %vm805, %v802, %v804
      %v812 = vadd.f32 %v782, %v806
      %v813 = vadd.f32 %v783, %v807
      %v814 = vadd.f32 %v784, %v808
      %815 = vst [vmem:[%s257] sm:$0x1f] %v812
      %816 = vst [vmem:[%s257 + $0x8] sm:$0x1f] %v813
      %817 = vst.msk [vmem:[%s257 + $0x10] sm:$0x1f] %vm464, %v814
      %v818 = vld [vmem:[%s257] sm:$0x1f]
      %v819 = vld [vmem:[%s257 + $0x8] sm:$0x1f]
      %v820 = vld [vmem:[%s257 + $0x10] sm:$0x1f]
      %v821 = vld [vmem:[#allocation2 + $0x20] sm:$0x80]
      %v822 = vld [vmem:[#allocation2 + $0x28] sm:$0x80]
      %v823 = vld [vmem:[#allocation2 + $0x30] sm:$0x80]
      %v824 = vld [vmem:[#allocation2 + $0x38] sm:$0x80]
      %v825 = vld [vmem:[#allocation2 + $0x40] sm:$0xf]
      %v826 = vld [vmem:[#allocation2 + $0x48] sm:$0xf]
      %v827 = vld [vmem:[#allocation2 + $0x50] sm:$0xf]
      %v828 = vld [vmem:[#allocation2 + $0x58] sm:$0xf]
      %vm837 = vcmask 1040384
      %v838 = vrot.slane %v821, 7
      %v839 = vrot.slane %v825, 7
      %v840 = vsel %vm837, %v838, %v839
      %v841 = vrot.slane %v822, 7
      %v842 = vrot.slane %v826, 7
      %v843 = vsel %vm837, %v841, %v842
      %v844 = vrot.slane %v823, 7
      %v845 = vrot.slane %v827, 7
      %v846 = vsel %vm837, %v844, %v845
      %v847 = vrot.slane %v824, 7
      %v848 = vrot.slane %v828, 7
      %v849 = vsel %vm837, %v847, %v848
      %850 = vrot.lane.b32.xlu0 %v840, 60
      %v851 = vpop.permute.xlu0 %850
      %852 = vrot.lane.b32.xlu0 %v843, 60
      %v853 = vpop.permute.xlu0 %852
      %854 = vrot.lane.b32.xlu0 %v846, 60
      %v855 = vpop.permute.xlu0 %854
      %856 = vrot.lane.b32.xlu0 %v849, 60
      %v857 = vpop.permute.xlu0 %856
      %vm858 = vcmask 490496
      %v859 = vsel %vm858, %v851, %v853
      %v860 = vsel %vm858, %v853, %v855
      %v861 = vsel %vm858, %v855, %v857
      %v865 = vadd.f32 %v818, %v859
      %v866 = vadd.f32 %v819, %v860
      %v867 = vadd.f32 %v820, %v861
      %868 = vst [vmem:[%s257] sm:$0x1f] %v865
      %869 = vst [vmem:[%s257 + $0x8] sm:$0x1f] %v866
      %870 = vst.msk [vmem:[%s257 + $0x10] sm:$0x1f] %vm464, %v867
      %v871 = vld [vmem:[%s257] sm:$0x1f]
      %v872 = vld [vmem:[%s257 + $0x8] sm:$0x1f]
      %v873 = vld [vmem:[%s257 + $0x10] sm:$0x1f]
      %v874 = vld [vmem:[#allocation2 + $0x40] sm:$0xf0]
      %v875 = vld [vmem:[#allocation2 + $0x48] sm:$0xf0]
      %v876 = vld [vmem:[#allocation2 + $0x50] sm:$0xf0]
      %v877 = vld [vmem:[#allocation2 + $0x58] sm:$0xf0]
      %v878 = vld [vmem:[#allocation2 + $0x60] sm:$0x1]
      %v879 = vld [vmem:[#allocation2 + $0x68] sm:$0x1]
      %v880 = vld [vmem:[#allocation2 + $0x70] sm:$0x1]
      %v881 = vld [vmem:[#allocation2 + $0x78] sm:$0x1]
      %v890 = vrot.slane %v874, 4
      %v891 = vrot.slane %v878, 4
      %v892 = vsel %vm277, %v890, %v891
      %v893 = vrot.slane %v875, 4
      %v894 = vrot.slane %v879, 4
      %v895 = vsel %vm277, %v893, %v894
      %v896 = vrot.slane %v876, 4
      %v897 = vrot.slane %v880, 4
      %v898 = vsel %vm277, %v896, %v897
      %v899 = vrot.slane %v877, 4
      %v900 = vrot.slane %v881, 4
      %v901 = vsel %vm277, %v899, %v900
      %902 = vrot.lane.b32.xlu0 %v892, 58
      %v903 = vpop.permute.xlu0 %902
      %904 = vrot.lane.b32.xlu0 %v895, 58
      %v905 = vpop.permute.xlu0 %904
      %906 = vrot.lane.b32.xlu0 %v898, 58
      %v907 = vpop.permute.xlu0 %906
      %908 = vrot.lane.b32.xlu0 %v901, 58
      %v909 = vpop.permute.xlu0 %908
      %vm910 = vcmask 474112
      %v911 = vsel %vm910, %v903, %v905
      %v912 = vsel %vm910, %v905, %v907
      %v913 = vsel %vm910, %v907, %v909
      %v917 = vadd.f32 %v871, %v911
      %v918 = vadd.f32 %v872, %v912
      %v919 = vadd.f32 %v873, %v913
      %920 = vst [vmem:[%s257] sm:$0x1f] %v917
      %921 = vst [vmem:[%s257 + $0x8] sm:$0x1f] %v918
      %922 = vst.msk [vmem:[%s257 + $0x10] sm:$0x1f] %vm464, %v919
      %v923 = vld [vmem:[%s257] sm:$0x1f]
      %v924 = vld [vmem:[%s257 + $0x8] sm:$0x1f]
      %v925 = vld [vmem:[%s257 + $0x10] sm:$0x1f]
      %v926 = vld [vmem:[#allocation2 + $0x60] sm:$0x3e]
      %v927 = vld [vmem:[#allocation2 + $0x68] sm:$0x3e]
      %v928 = vld [vmem:[#allocation2 + $0x70] sm:$0x3e]
      %v929 = vld [vmem:[#allocation2 + $0x78] sm:$0x3e]
      %v934 = vrot.slane %v926, 1
      %v935 = vrot.slane %v927, 1
      %v936 = vrot.slane %v928, 1
      %v937 = vrot.slane %v929, 1
      %938 = vrot.lane.b32.xlu0 %v934, 38
      %v939 = vpop.permute.xlu0 %938
      %940 = vrot.lane.b32.xlu0 %v935, 38
      %v941 = vpop.permute.xlu0 %940
      %942 = vrot.lane.b32.xlu0 %v936, 38
      %v943 = vpop.permute.xlu0 %942
      %944 = vrot.lane.b32.xlu0 %v937, 38
      %v945 = vpop.permute.xlu0 %944
      %vm946 = vcmask 310272
      %v947 = vsel %vm946, %v939, %v941
      %v948 = vsel %vm946, %v941, %v943
      %v949 = vsel %vm946, %v943, %v945
      %v953 = vadd.f32 %v923, %v947
      %v954 = vadd.f32 %v924, %v948
      %v955 = vadd.f32 %v925, %v949
      %956 = vst [vmem:[%s257] sm:$0x1f] %v953
      %957 = vst [vmem:[%s257 + $0x8] sm:$0x1f] %v954
      %958 = vst.msk [vmem:[%s257 + $0x10] sm:$0x1f] %vm464, %v955
      %v959 = vld [vmem:[%s257] sm:$0x1f]
      %v960 = vld [vmem:[%s257 + $0x8] sm:$0x1f]
      %v961 = vld [vmem:[%s257 + $0x10] sm:$0x1f]
      %v962 = vld [vmem:[#allocation2 + $0x60] sm:$0xc0]
      %v963 = vld [vmem:[#allocation2 + $0x68] sm:$0xc0]
      %v964 = vld [vmem:[#allocation2 + $0x70] sm:$0xc0]
      %v965 = vld [vmem:[#allocation2 + $0x78] sm:$0xc0]
      %v966 = vld [vmem:[#allocation2 + $0x80] sm:$0x7]
      %v967 = vld [vmem:[#allocation2 + $0x88] sm:$0x7]
      %v968 = vld [vmem:[#allocation2 + $0x90] sm:$0x7]
      %v969 = vld [vmem:[#allocation2 + $0x98] sm:$0x7]
      %vm978 = vcmask 1041408
      %v979 = vrot.slane %v962, 6
      %v980 = vrot.slane %v966, 6
      %v981 = vsel %vm978, %v979, %v980
      %v982 = vrot.slane %v963, 6
      %v983 = vrot.slane %v967, 6
      %v984 = vsel %vm978, %v982, %v983
      %v985 = vrot.slane %v964, 6
      %v986 = vrot.slane %v968, 6
      %v987 = vsel %vm978, %v985, %v986
      %v988 = vrot.slane %v965, 6
      %v989 = vrot.slane %v969, 6
      %v990 = vsel %vm978, %v988, %v989
      %991 = vrot.lane.b32.xlu0 %v981, 37
      %v992 = vpop.permute.xlu0 %991
      %993 = vrot.lane.b32.xlu0 %v984, 37
      %v994 = vpop.permute.xlu0 %993
      %995 = vrot.lane.b32.xlu0 %v987, 37
      %v996 = vpop.permute.xlu0 %995
      %997 = vrot.lane.b32.xlu0 %v990, 37
      %v998 = vpop.permute.xlu0 %997
      %vm999 = vcmask 302080
      %v1000 = vsel %vm999, %v992, %v994
      %v1001 = vsel %vm999, %v994, %v996
      %v1002 = vsel %vm999, %v996, %v998
      %v1006 = vadd.f32 %v959, %v1000
      %v1007 = vadd.f32 %v960, %v1001
      %v1008 = vadd.f32 %v961, %v1002
      %1009 = vst [vmem:[%s257] sm:$0x1f] %v1006
      %1010 = vst [vmem:[%s257 + $0x8] sm:$0x1f] %v1007
      %1011 = vst.msk [vmem:[%s257 + $0x10] sm:$0x1f] %vm464, %v1008
      %v1012 = vld [vmem:[%s257] sm:$0x1f]
      %v1013 = vld [vmem:[%s257 + $0x8] sm:$0x1f]
      %v1014 = vld [vmem:[%s257 + $0x10] sm:$0x1f]
      %v1015 = vld [vmem:[#allocation2 + $0x80] sm:$0xf8]
      %v1016 = vld [vmem:[#allocation2 + $0x88] sm:$0xf8]
      %v1017 = vld [vmem:[#allocation2 + $0x90] sm:$0xf8]
      %v1018 = vld [vmem:[#allocation2 + $0x98] sm:$0xf8]
      %v1023 = vrot.slane %v1015, 3
      %v1024 = vrot.slane %v1016, 3
      %v1025 = vrot.slane %v1017, 3
      %v1026 = vrot.slane %v1018, 3
      %1027 = vrot.lane.b32.xlu0 %v1023, 36
      %v1028 = vpop.permute.xlu0 %1027
      %1029 = vrot.lane.b32.xlu0 %v1024, 36
      %v1030 = vpop.permute.xlu0 %1029
      %1031 = vrot.lane.b32.xlu0 %v1025, 36
      %v1032 = vpop.permute.xlu0 %1031
      %1033 = vrot.lane.b32.xlu0 %v1026, 36
      %v1034 = vpop.permute.xlu0 %1033
      %vm1035 = vcmask 293888
      %v1036 = vsel %vm1035, %v1028, %v1030
      %v1037 = vsel %vm1035, %v1030, %v1032
      %v1038 = vsel %vm1035, %v1032, %v1034
      %v1042 = vadd.f32 %v1012, %v1036
      %v1043 = vadd.f32 %v1013, %v1037
      %v1044 = vadd.f32 %v1014, %v1038
      %1045 = vst [vmem:[%s257] sm:$0x1f] %v1042
      %1046 = vst [vmem:[%s257 + $0x8] sm:$0x1f] %v1043
      %1047 = vst.msk [vmem:[%s257 + $0x10] sm:$0x1f] %vm464, %v1044
      %s1048 = scalar_lea.vmem %s248, 40
      %v1049 = vld [vmem:[%s1048] sm:$0xff]
      %v1050 = vld [vmem:[%s1048 + $0x8] sm:$0xff]
      %v1051 = vld [vmem:[%s1048 + $0x10] sm:$0xff]
      %v1052 = vld [vmem:[%s1048 + $0x18] sm:$0xff]
      %v1053 = vld [vmem:[%s1048 + $0x20] sm:$0xff]
      %v1055 = vsel %vm273, %v1049, 0
      %v1058 = vsel %vm273, %v1050, 0
      %v1061 = vsel %vm273, %v1051, 0
      %v1064 = vsel %vm273, %v1052, 0
      %v1067 = vsel %vm273, %v1053, 0
      %1069 = vmatprep.subr.mxu0 0.0
      %1070 = vmatpush1.msra.mxu0 0.0
      %1071 = vmatprep.subr.mxu0 0.0
      %1072 = vmatpush1.msra.mxu0 0.0
      %1073 = vmatprep.subr.mxu0 0.0
      %1074 = vmatpush1.msra.mxu0 0.0
      %1075 = vmatprep.subr.mxu0 0.0
      %1076 = vmatpush1.msra.mxu0 0.0
      %1077 = vmatprep.subr.mxu0 0.0
      %1078 = vmatpush1.msra.mxu0 0.0
      %1079 = vmatprep.subr.mxu0 0.0
      %1080 = vmatpush1.msra.mxu0 0.0
      %1081 = vmatprep.subr.mxu0 0.0
      %1082 = vmatpush1.msra.mxu0 0.0
      %1083 = vmatprep.subr.mxu0 0.0
      %1084 = vmatpush1.msra.mxu0 0.0
      %1085 = vmatprep.subr.mxu0 0.0
      %1086 = vmatpush1.msra.mxu0 0.0
      %1087 = vmatprep.subr.mxu0 0.0
      %1088 = vmatpush1.msra.mxu0 0.0
      %1089 = vmatprep.subr.mxu0 0.0
      %1090 = vmatpush1.msra.mxu0 0.0
      %1091 = vmatprep.subr.mxu0 0.0
      %1092 = vmatpush1.msra.mxu0 0.0
      %1093 = vmatprep.subr.mxu0 0.0
      %1094 = vmatpush1.msra.mxu0 0.0
      %1095 = vmatprep.subr.mxu0 0.0
      %1096 = vmatpush1.msra.mxu0 0.0
      %1097 = vmatprep.subr.mxu0 0.0
      %1098 = vmatpush1.msra.mxu0 0.0
      %1099 = vmatprep.subr.mxu0 %v280
      %1100 = vmatpush1.msra.mxu0 %v278
      %1101 = vmatprep.subr.mxu0 0.0
      %1102 = vmatpush2.msra.mxu0 0.0
      %1103 = vmatprep.subr.mxu0 0.0
      %1104 = vmatpush2.msra.mxu0 0.0
      %1105 = vmatprep.subr.mxu0 0.0
      %1106 = vmatpush2.msra.mxu0 0.0
      %1107 = vmatprep.subr.mxu0 0.0
      %1108 = vmatpush2.msra.mxu0 0.0
      %1109 = vmatprep.subr.mxu0 0.0
      %1110 = vmatpush2.msra.mxu0 0.0
      %1111 = vmatprep.subr.mxu0 0.0
      %1112 = vmatpush2.msra.mxu0 0.0
      %1113 = vmatprep.subr.mxu0 0.0
      %1114 = vmatpush2.msra.mxu0 0.0
      %1115 = vmatprep.subr.mxu0 0.0
      %1116 = vmatpush2.msra.mxu0 0.0
      %1117 = vmatprep.subr.mxu0 0.0
      %1118 = vmatpush2.msra.mxu0 0.0
      %1119 = vmatprep.subr.mxu0 0.0
      %1120 = vmatpush2.msra.mxu0 0.0
      %1121 = vmatprep.subr.mxu0 0.0
      %1122 = vmatpush2.msra.mxu0 0.0
      %1123 = vmatprep.subr.mxu0 0.0
      %1124 = vmatpush2.msra.mxu0 0.0
      %1125 = vmatprep.subr.mxu0 0.0
      %1126 = vmatpush2.msra.mxu0 0.0
      %1127 = vmatprep.subr.mxu0 0.0
      %1128 = vmatpush2.msra.mxu0 0.0
      %1129 = vmatprep.subr.mxu0 0.0
      %1130 = vmatpush2.msra.mxu0 0.0
      %1131 = vmatprep.subr.mxu0 0.0
      %1132 = vmatpush2.msra.mxu0 0.0
      %1133 = vmatprep.mubr.f32.mxu0 0.0
      %1134 = vmatmul.mubr.f32.gmra.mxu0 %v1055
      %v1135 = vpop.f32.mrf.mxu0
      %v1136 = vadd.f32 0.0, %v1135
      %v1137 = vpop.f32.mrf.mxu0
      %v1138 = vadd.f32 0.0, %v1137
      %1139 = vmatprep.mubr.f32.mxu0 0.0
      %1140 = vmatmul.mubr.f32.gmra.mxu0 %v1058
      %v1141 = vpop.f32.mrf.mxu0
      %v1142 = vadd.f32 0.0, %v1141
      %v1143 = vpop.f32.mrf.mxu0
      %v1144 = vadd.f32 0.0, %v1143
      %1145 = vmatprep.mubr.f32.mxu0 0.0
      %1146 = vmatmul.mubr.f32.gmra.mxu0 %v1061
      %v1147 = vpop.f32.mrf.mxu0
      %v1148 = vadd.f32 0.0, %v1147
      %v1149 = vpop.f32.mrf.mxu0
      %v1150 = vadd.f32 0.0, %v1149
      %1151 = vmatprep.mubr.f32.mxu0 0.0
      %1152 = vmatmul.mubr.f32.gmra.mxu0 %v1064
      %v1153 = vpop.f32.mrf.mxu0
      %v1154 = vadd.f32 0.0, %v1153
      %v1155 = vpop.f32.mrf.mxu0
      %v1156 = vadd.f32 0.0, %v1155
      %1157 = vmatprep.mubr.f32.mxu0 0.0
      %1158 = vmatmul.mubr.f32.gmra.mxu0 %v1067
      %v1159 = vpop.f32.mrf.mxu0
      %v1160 = vadd.f32 0.0, %v1159
      %v1161 = vpop.f32.mrf.mxu0
      %v1162 = vadd.f32 0.0, %v1161
      %1163 = vdwg.mxu0
      %1164 = vmatprep.subr.mxu0 0.0
      %1165 = vmatpush1.msra.mxu0 0.0
      %1166 = vmatprep.subr.mxu0 0.0
      %1167 = vmatpush1.msra.mxu0 0.0
      %1168 = vmatprep.subr.mxu0 0.0
      %1169 = vmatpush1.msra.mxu0 0.0
      %1170 = vmatprep.subr.mxu0 0.0
      %1171 = vmatpush1.msra.mxu0 0.0
      %1172 = vmatprep.subr.mxu0 0.0
      %1173 = vmatpush1.msra.mxu0 0.0
      %1174 = vmatprep.subr.mxu0 0.0
      %1175 = vmatpush1.msra.mxu0 0.0
      %1176 = vmatprep.subr.mxu0 0.0
      %1177 = vmatpush1.msra.mxu0 0.0
      %1178 = vmatprep.subr.mxu0 0.0
      %1179 = vmatpush1.msra.mxu0 0.0
      %1180 = vmatprep.subr.mxu0 0.0
      %1181 = vmatpush1.msra.mxu0 0.0
      %1182 = vmatprep.subr.mxu0 0.0
      %1183 = vmatpush1.msra.mxu0 0.0
      %1184 = vmatprep.subr.mxu0 0.0
      %1185 = vmatpush1.msra.mxu0 0.0
      %1186 = vmatprep.subr.mxu0 0.0
      %1187 = vmatpush1.msra.mxu0 0.0
      %1188 = vmatprep.subr.mxu0 0.0
      %1189 = vmatpush1.msra.mxu0 0.0
      %1190 = vmatprep.subr.mxu0 0.0
      %1191 = vmatpush1.msra.mxu0 0.0
      %1192 = vmatprep.subr.mxu0 0.0
      %1193 = vmatpush1.msra.mxu0 0.0
      %1194 = vmatprep.subr.mxu0 %v284
      %1195 = vmatpush1.msra.mxu0 %v282
      %1196 = vmatprep.subr.mxu0 0.0
      %1197 = vmatpush2.msra.mxu0 0.0
      %1198 = vmatprep.subr.mxu0 0.0
      %1199 = vmatpush2.msra.mxu0 0.0
      %1200 = vmatprep.subr.mxu0 0.0
      %1201 = vmatpush2.msra.mxu0 0.0
      %1202 = vmatprep.subr.mxu0 0.0
      %1203 = vmatpush2.msra.mxu0 0.0
      %1204 = vmatprep.subr.mxu0 0.0
      %1205 = vmatpush2.msra.mxu0 0.0
      %1206 = vmatprep.subr.mxu0 0.0
      %1207 = vmatpush2.msra.mxu0 0.0
      %1208 = vmatprep.subr.mxu0 0.0
      %1209 = vmatpush2.msra.mxu0 0.0
      %1210 = vmatprep.subr.mxu0 0.0
      %1211 = vmatpush2.msra.mxu0 0.0
      %1212 = vmatprep.subr.mxu0 0.0
      %1213 = vmatpush2.msra.mxu0 0.0
      %1214 = vmatprep.subr.mxu0 0.0
      %1215 = vmatpush2.msra.mxu0 0.0
      %1216 = vmatprep.subr.mxu0 0.0
      %1217 = vmatpush2.msra.mxu0 0.0
      %1218 = vmatprep.subr.mxu0 0.0
      %1219 = vmatpush2.msra.mxu0 0.0
      %1220 = vmatprep.subr.mxu0 0.0
      %1221 = vmatpush2.msra.mxu0 0.0
      %1222 = vmatprep.subr.mxu0 0.0
      %1223 = vmatpush2.msra.mxu0 0.0
      %1224 = vmatprep.subr.mxu0 0.0
      %1225 = vmatpush2.msra.mxu0 0.0
      %1226 = vmatprep.subr.mxu0 0.0
      %1227 = vmatpush2.msra.mxu0 0.0
      %1228 = vmatprep.mubr.f32.mxu0 0.0
      %1229 = vmatmul.mubr.f32.gmra.mxu0 %v1055
      %v1230 = vpop.f32.mrf.mxu0
      %v1231 = vadd.f32 0.0, %v1230
      %v1232 = vpop.f32.mrf.mxu0
      %v1233 = vadd.f32 0.0, %v1232
      %1234 = vmatprep.mubr.f32.mxu0 0.0
      %1235 = vmatmul.mubr.f32.gmra.mxu0 %v1058
      %v1236 = vpop.f32.mrf.mxu0
      %v1237 = vadd.f32 0.0, %v1236
      %v1238 = vpop.f32.mrf.mxu0
      %v1239 = vadd.f32 0.0, %v1238
      %1240 = vmatprep.mubr.f32.mxu0 0.0
      %1241 = vmatmul.mubr.f32.gmra.mxu0 %v1061
      %v1242 = vpop.f32.mrf.mxu0
      %v1243 = vadd.f32 0.0, %v1242
      %v1244 = vpop.f32.mrf.mxu0
      %v1245 = vadd.f32 0.0, %v1244
      %1246 = vmatprep.mubr.f32.mxu0 0.0
      %1247 = vmatmul.mubr.f32.gmra.mxu0 %v1064
      %v1248 = vpop.f32.mrf.mxu0
      %v1249 = vadd.f32 0.0, %v1248
      %v1250 = vpop.f32.mrf.mxu0
      %v1251 = vadd.f32 0.0, %v1250
      %1252 = vmatprep.mubr.f32.mxu0 0.0
      %1253 = vmatmul.mubr.f32.gmra.mxu0 %v1067
      %v1254 = vpop.f32.mrf.mxu0
      %v1255 = vadd.f32 0.0, %v1254
      %v1256 = vpop.f32.mrf.mxu0
      %v1257 = vadd.f32 0.0, %v1256
      %1258 = vdwg.mxu0
      %1259 = vst [vmem:[#allocation2] sm:$0xff] %v1136
      %1260 = vst [vmem:[#allocation2 + $0x8] sm:$0xff] %v1138
      %1261 = vst [vmem:[#allocation2 + $0x10] sm:$0xff] %v1231
      %1262 = vst.msk [vmem:[#allocation2 + $0x18] sm:$0xff] %vm679, %v1233
      %1263 = vst [vmem:[#allocation2 + $0x20] sm:$0xff] %v1142
      %1264 = vst [vmem:[#allocation2 + $0x28] sm:$0xff] %v1144
      %1265 = vst [vmem:[#allocation2 + $0x30] sm:$0xff] %v1237
      %1266 = vst.msk [vmem:[#allocation2 + $0x38] sm:$0xff] %vm679, %v1239
      %1267 = vst [vmem:[#allocation2 + $0x40] sm:$0xff] %v1148
      %1268 = vst [vmem:[#allocation2 + $0x48] sm:$0xff] %v1150
      %1269 = vst [vmem:[#allocation2 + $0x50] sm:$0xff] %v1243
      %1270 = vst.msk [vmem:[#allocation2 + $0x58] sm:$0xff] %vm679, %v1245
      %1271 = vst [vmem:[#allocation2 + $0x60] sm:$0xff] %v1154
      %1272 = vst [vmem:[#allocation2 + $0x68] sm:$0xff] %v1156
      %1273 = vst [vmem:[#allocation2 + $0x70] sm:$0xff] %v1249
      %1274 = vst.msk [vmem:[#allocation2 + $0x78] sm:$0xff] %vm679, %v1251
      %1275 = vst [vmem:[#allocation2 + $0x80] sm:$0xff] %v1160
      %1276 = vst [vmem:[#allocation2 + $0x88] sm:$0xff] %v1162
      %1277 = vst [vmem:[#allocation2 + $0x90] sm:$0xff] %v1255
      %1278 = vst.msk [vmem:[#allocation2 + $0x98] sm:$0xff] %vm679, %v1257
      %v1279 = vld [vmem:[%s257] sm:$0x1f]
      %v1280 = vld [vmem:[%s257 + $0x8] sm:$0x1f]
      %v1281 = vld [vmem:[%s257 + $0x10] sm:$0x1f]
      %v1282 = vld [vmem:[#allocation2] sm:$0x1f]
      %v1283 = vld [vmem:[#allocation2 + $0x8] sm:$0x1f]
      %v1284 = vld [vmem:[#allocation2 + $0x10] sm:$0x1f]
      %1288 = vrot.lane.b32.xlu0 %v1282, 105
      %v1289 = vpop.permute.xlu0 %1288
      %1290 = vrot.lane.b32.xlu0 %v1283, 105
      %v1291 = vpop.permute.xlu0 %1290
      %1292 = vrot.lane.b32.xlu0 %v1284, 105
      %v1293 = vpop.permute.xlu0 %1292
      %vm1294 = vcmask 859136
      %v1295 = vsel %vm1294, %v1289, %v1291
      %v1296 = vsel %vm1294, %v1291, %v1293
      %v1300 = vadd.f32 %v1279, %v1295
      %v1301 = vadd.f32 %v1280, %v1296
      %v1302 = vadd.f32 %v1281, %v1293
      %1303 = vst [vmem:[%s257] sm:$0x1f] %v1300
      %1304 = vst [vmem:[%s257 + $0x8] sm:$0x1f] %v1301
      %1305 = vst.msk [vmem:[%s257 + $0x10] sm:$0x1f] %vm464, %v1302
      %v1306 = vld [vmem:[%s257] sm:$0x1f]
      %v1307 = vld [vmem:[%s257 + $0x8] sm:$0x1f]
      %v1308 = vld [vmem:[%s257 + $0x10] sm:$0x1f]
      %v1309 = vld [vmem:[#allocation2] sm:$0xe0]
      %v1310 = vld [vmem:[#allocation2 + $0x8] sm:$0xe0]
      %v1311 = vld [vmem:[#allocation2 + $0x10] sm:$0xe0]
      %v1312 = vld [vmem:[#allocation2 + $0x20] sm:$0x3]
      %v1313 = vld [vmem:[#allocation2 + $0x28] sm:$0x3]
      %v1314 = vld [vmem:[#allocation2 + $0x30] sm:$0x3]
      %v1321 = vrot.slane %v1309, 5
      %v1322 = vrot.slane %v1312, 5
      %v1323 = vsel %vm748, %v1321, %v1322
      %v1324 = vrot.slane %v1310, 5
      %v1325 = vrot.slane %v1313, 5
      %v1326 = vsel %vm748, %v1324, %v1325
      %v1327 = vrot.slane %v1311, 5
      %v1328 = vrot.slane %v1314, 5
      %v1329 = vsel %vm748, %v1327, %v1328
      %1330 = vrot.lane.b32.xlu0 %v1323, 103
      %v1331 = vpop.permute.xlu0 %1330
      %1332 = vrot.lane.b32.xlu0 %v1326, 103
      %v1333 = vpop.permute.xlu0 %1332
      %1334 = vrot.lane.b32.xlu0 %v1329, 103
      %v1335 = vpop.permute.xlu0 %1334
      %vm1336 = vcmask 842752
      %v1337 = vsel %vm1336, %v1331, %v1333
      %v1338 = vsel %vm1336, %v1333, %v1335
      %v1342 = vadd.f32 %v1306, %v1337
      %v1343 = vadd.f32 %v1307, %v1338
      %v1344 = vadd.f32 %v1308, %v1335
      %1345 = vst [vmem:[%s257] sm:$0x1f] %v1342
      %1346 = vst [vmem:[%s257 + $0x8] sm:$0x1f] %v1343
      %1347 = vst.msk [vmem:[%s257 + $0x10] sm:$0x1f] %vm464, %v1344
      %v1348 = vld [vmem:[%s257] sm:$0x1f]
      %v1349 = vld [vmem:[%s257 + $0x8] sm:$0x1f]
      %v1350 = vld [vmem:[%s257 + $0x10] sm:$0x1f]
      %v1351 = vld [vmem:[#allocation2 + $0x20] sm:$0x7c]
      %v1352 = vld [vmem:[#allocation2 + $0x28] sm:$0x7c]
      %v1353 = vld [vmem:[#allocation2 + $0x30] sm:$0x7c]
      %v1357 = vrot.slane %v1351, 2
      %v1358 = vrot.slane %v1352, 2
      %v1359 = vrot.slane %v1353, 2
      %1360 = vrot.lane.b32.xlu0 %v1357, 101
      %v1361 = vpop.permute.xlu0 %1360
      %1362 = vrot.lane.b32.xlu0 %v1358, 101
      %v1363 = vpop.permute.xlu0 %1362
      %1364 = vrot.lane.b32.xlu0 %v1359, 101
      %v1365 = vpop.permute.xlu0 %1364
      %vm1366 = vcmask 826368
      %v1367 = vsel %vm1366, %v1361, %v1363
      %v1368 = vsel %vm1366, %v1363, %v1365
      %v1372 = vadd.f32 %v1348, %v1367
      %v1373 = vadd.f32 %v1349, %v1368
      %v1374 = vadd.f32 %v1350, %v1365
      %1375 = vst [vmem:[%s257] sm:$0x1f] %v1372
      %1376 = vst [vmem:[%s257 + $0x8] sm:$0x1f] %v1373
      %1377 = vst.msk [vmem:[%s257 + $0x10] sm:$0x1f] %vm464, %v1374
      %v1378 = vld [vmem:[%s257] sm:$0x1f]
      %v1379 = vld [vmem:[%s257 + $0x8] sm:$0x1f]
      %v1380 = vld [vmem:[%s257 + $0x10] sm:$0x1f]
      %v1381 = vld [vmem:[#allocation2 + $0x20] sm:$0x80]
      %v1382 = vld [vmem:[#allocation2 + $0x28] sm:$0x80]
      %v1383 = vld [vmem:[#allocation2 + $0x30] sm:$0x80]
      %v1384 = vld [vmem:[#allocation2 + $0x38] sm:$0x80]
      %v1385 = vld [vmem:[#allocation2 + $0x40] sm:$0xf]
      %v1386 = vld [vmem:[#allocation2 + $0x48] sm:$0xf]
      %v1387 = vld [vmem:[#allocation2 + $0x50] sm:$0xf]
      %v1388 = vld [vmem:[#allocation2 + $0x58] sm:$0xf]
      %v1397 = vrot.slane %v1381, 7
      %v1398 = vrot.slane %v1385, 7
      %v1399 = vsel %vm837, %v1397, %v1398
      %v1400 = vrot.slane %v1382, 7
      %v1401 = vrot.slane %v1386, 7
      %v1402 = vsel %vm837, %v1400, %v1401
      %v1403 = vrot.slane %v1383, 7
      %v1404 = vrot.slane %v1387, 7
      %v1405 = vsel %vm837, %v1403, %v1404
      %v1406 = vrot.slane %v1384, 7
      %v1407 = vrot.slane %v1388, 7
      %v1408 = vsel %vm837, %v1406, %v1407
      %1409 = vrot.lane.b32.xlu0 %v1399, 61
      %v1410 = vpop.permute.xlu0 %1409
      %1411 = vrot.lane.b32.xlu0 %v1402, 61
      %v1412 = vpop.permute.xlu0 %1411
      %1413 = vrot.lane.b32.xlu0 %v1405, 61
      %v1414 = vpop.permute.xlu0 %1413
      %1415 = vrot.lane.b32.xlu0 %v1408, 61
      %v1416 = vpop.permute.xlu0 %1415
      %vm1417 = vcmask 498688
      %v1418 = vsel %vm1417, %v1410, %v1412
      %v1419 = vsel %vm1417, %v1412, %v1414
      %v1420 = vsel %vm1417, %v1414, %v1416
      %v1424 = vadd.f32 %v1378, %v1418
      %v1425 = vadd.f32 %v1379, %v1419
      %v1426 = vadd.f32 %v1380, %v1420
      %1427 = vst [vmem:[%s257] sm:$0x1f] %v1424
      %1428 = vst [vmem:[%s257 + $0x8] sm:$0x1f] %v1425
      %1429 = vst.msk [vmem:[%s257 + $0x10] sm:$0x1f] %vm464, %v1426
      %v1430 = vld [vmem:[%s257] sm:$0x1f]
      %v1431 = vld [vmem:[%s257 + $0x8] sm:$0x1f]
      %v1432 = vld [vmem:[%s257 + $0x10] sm:$0x1f]
      %v1433 = vld [vmem:[#allocation2 + $0x40] sm:$0xf0]
      %v1434 = vld [vmem:[#allocation2 + $0x48] sm:$0xf0]
      %v1435 = vld [vmem:[#allocation2 + $0x50] sm:$0xf0]
      %v1436 = vld [vmem:[#allocation2 + $0x58] sm:$0xf0]
      %v1437 = vld [vmem:[#allocation2 + $0x60] sm:$0x1]
      %v1438 = vld [vmem:[#allocation2 + $0x68] sm:$0x1]
      %v1439 = vld [vmem:[#allocation2 + $0x70] sm:$0x1]
      %v1440 = vld [vmem:[#allocation2 + $0x78] sm:$0x1]
      %v1449 = vrot.slane %v1433, 4
      %v1450 = vrot.slane %v1437, 4
      %v1451 = vsel %vm277, %v1449, %v1450
      %v1452 = vrot.slane %v1434, 4
      %v1453 = vrot.slane %v1438, 4
      %v1454 = vsel %vm277, %v1452, %v1453
      %v1455 = vrot.slane %v1435, 4
      %v1456 = vrot.slane %v1439, 4
      %v1457 = vsel %vm277, %v1455, %v1456
      %v1458 = vrot.slane %v1436, 4
      %v1459 = vrot.slane %v1440, 4
      %v1460 = vsel %vm277, %v1458, %v1459
      %1461 = vrot.lane.b32.xlu0 %v1451, 57
      %v1462 = vpop.permute.xlu0 %1461
      %1463 = vrot.lane.b32.xlu0 %v1454, 57
      %v1464 = vpop.permute.xlu0 %1463
      %1465 = vrot.lane.b32.xlu0 %v1457, 57
      %v1466 = vpop.permute.xlu0 %1465
      %1467 = vrot.lane.b32.xlu0 %v1460, 57
      %v1468 = vpop.permute.xlu0 %1467
      %vm1469 = vcmask 465920
      %v1470 = vsel %vm1469, %v1462, %v1464
      %v1471 = vsel %vm1469, %v1464, %v1466
      %v1472 = vsel %vm1469, %v1466, %v1468
      %v1476 = vadd.f32 %v1430, %v1470
      %v1477 = vadd.f32 %v1431, %v1471
      %v1478 = vadd.f32 %v1432, %v1472
      %1479 = vst [vmem:[%s257] sm:$0x1f] %v1476
      %1480 = vst [vmem:[%s257 + $0x8] sm:$0x1f] %v1477
      %1481 = vst.msk [vmem:[%s257 + $0x10] sm:$0x1f] %vm464, %v1478
      %v1482 = vld [vmem:[%s257] sm:$0x1f]
      %v1483 = vld [vmem:[%s257 + $0x8] sm:$0x1f]
      %v1484 = vld [vmem:[%s257 + $0x10] sm:$0x1f]
      %v1485 = vld [vmem:[#allocation2 + $0x60] sm:$0x3e]
      %v1486 = vld [vmem:[#allocation2 + $0x68] sm:$0x3e]
      %v1487 = vld [vmem:[#allocation2 + $0x70] sm:$0x3e]
      %v1488 = vld [vmem:[#allocation2 + $0x78] sm:$0x3e]
      %v1493 = vrot.slane %v1485, 1
      %v1494 = vrot.slane %v1486, 1
      %v1495 = vrot.slane %v1487, 1
      %v1496 = vrot.slane %v1488, 1
      %1497 = vrot.lane.b32.xlu0 %v1493, 17
      %v1498 = vpop.permute.xlu0 %1497
      %1499 = vrot.lane.b32.xlu0 %v1494, 17
      %v1500 = vpop.permute.xlu0 %1499
      %1501 = vrot.lane.b32.xlu0 %v1495, 17
      %v1502 = vpop.permute.xlu0 %1501
      %1503 = vrot.lane.b32.xlu0 %v1496, 17
      %v1504 = vpop.permute.xlu0 %1503
      %vm1505 = vcmask 138240
      %v1506 = vsel %vm1505, %v1498, %v1500
      %v1507 = vsel %vm1505, %v1500, %v1502
      %v1508 = vsel %vm1505, %v1502, %v1504
      %v1512 = vadd.f32 %v1482, %v1506
      %v1513 = vadd.f32 %v1483, %v1507
      %v1514 = vadd.f32 %v1484, %v1508
      %1515 = vst [vmem:[%s257] sm:$0x1f] %v1512
      %1516 = vst [vmem:[%s257 + $0x8] sm:$0x1f] %v1513
      %1517 = vst.msk [vmem:[%s257 + $0x10] sm:$0x1f] %vm464, %v1514
      %v1518 = vld [vmem:[%s257] sm:$0x1f]
      %v1519 = vld [vmem:[%s257 + $0x8] sm:$0x1f]
      %v1520 = vld [vmem:[%s257 + $0x10] sm:$0x1f]
      %v1521 = vld [vmem:[#allocation2 + $0x60] sm:$0xc0]
      %v1522 = vld [vmem:[#allocation2 + $0x68] sm:$0xc0]
      %v1523 = vld [vmem:[#allocation2 + $0x70] sm:$0xc0]
      %v1524 = vld [vmem:[#allocation2 + $0x78] sm:$0xc0]
      %v1525 = vld [vmem:[#allocation2 + $0x80] sm:$0x7]
      %v1526 = vld [vmem:[#allocation2 + $0x88] sm:$0x7]
      %v1527 = vld [vmem:[#allocation2 + $0x90] sm:$0x7]
      %v1528 = vld [vmem:[#allocation2 + $0x98] sm:$0x7]
      %v1537 = vrot.slane %v1521, 6
      %v1538 = vrot.slane %v1525, 6
      %v1539 = vsel %vm978, %v1537, %v1538
      %v1540 = vrot.slane %v1522, 6
      %v1541 = vrot.slane %v1526, 6
      %v1542 = vsel %vm978, %v1540, %v1541
      %v1543 = vrot.slane %v1523, 6
      %v1544 = vrot.slane %v1527, 6
      %v1545 = vsel %vm978, %v1543, %v1544
      %v1546 = vrot.slane %v1524, 6
      %v1547 = vrot.slane %v1528, 6
      %v1548 = vsel %vm978, %v1546, %v1547
      %1549 = vrot.lane.b32.xlu0 %v1539, 15
      %v1550 = vpop.permute.xlu0 %1549
      %1551 = vrot.lane.b32.xlu0 %v1542, 15
      %v1552 = vpop.permute.xlu0 %1551
      %1553 = vrot.lane.b32.xlu0 %v1545, 15
      %v1554 = vpop.permute.xlu0 %1553
      %1555 = vrot.lane.b32.xlu0 %v1548, 15
      %v1556 = vpop.permute.xlu0 %1555
      %vm1557 = vcmask 121856
      %v1558 = vsel %vm1557, %v1550, %v1552
      %v1559 = vsel %vm1557, %v1552, %v1554
      %v1560 = vsel %vm1557, %v1554, %v1556
      %v1564 = vadd.f32 %v1518, %v1558
      %v1565 = vadd.f32 %v1519, %v1559
      %v1566 = vadd.f32 %v1520, %v1560
      %1567 = vst [vmem:[%s257] sm:$0x1f] %v1564
      %1568 = vst [vmem:[%s257 + $0x8] sm:$0x1f] %v1565
      %1569 = vst.msk [vmem:[%s257 + $0x10] sm:$0x1f] %vm464, %v1566
      %v1570 = vld [vmem:[%s257] sm:$0x1f]
      %v1571 = vld [vmem:[%s257 + $0x8] sm:$0x1f]
      %v1572 = vld [vmem:[%s257 + $0x10] sm:$0x1f]
      %v1573 = vld [vmem:[#allocation2 + $0x80] sm:$0xf8]
      %v1574 = vld [vmem:[#allocation2 + $0x88] sm:$0xf8]
      %v1575 = vld [vmem:[#allocation2 + $0x90] sm:$0xf8]
      %v1576 = vld [vmem:[#allocation2 + $0x98] sm:$0xf8]
      %v1581 = vrot.slane %v1573, 3
      %v1582 = vrot.slane %v1574, 3
      %v1583 = vrot.slane %v1575, 3
      %v1584 = vrot.slane %v1576, 3
      %1585 = vrot.lane.b32.xlu0 %v1581, 13
      %v1586 = vpop.permute.xlu0 %1585
      %1587 = vrot.lane.b32.xlu0 %v1582, 13
      %v1588 = vpop.permute.xlu0 %1587
      %1589 = vrot.lane.b32.xlu0 %v1583, 13
      %v1590 = vpop.permute.xlu0 %1589
      %1591 = vrot.lane.b32.xlu0 %v1584, 13
      %v1592 = vpop.permute.xlu0 %1591
      %vm1593 = vcmask 105472
      %v1594 = vsel %vm1593, %v1586, %v1588
      %v1595 = vsel %vm1593, %v1588, %v1590
      %v1596 = vsel %vm1593, %v1590, %v1592
      %v1600 = vadd.f32 %v1570, %v1594
      %v1601 = vadd.f32 %v1571, %v1595
      %v1602 = vadd.f32 %v1572, %v1596
      %1603 = vst [vmem:[%s257] sm:$0x1f] %v1600
      %1604 = vst [vmem:[%s257 + $0x8] sm:$0x1f] %v1601
      %1605 = vst.msk [vmem:[%s257 + $0x10] sm:$0x1f] %vm464, %v1602
      %s1606 = scalar_lea.vmem %s248, 80
      %v1607 = vld [vmem:[%s1606] sm:$0xff]
      %v1608 = vld [vmem:[%s1606 + $0x8] sm:$0xff]
      %v1609 = vld [vmem:[%s1606 + $0x10] sm:$0xff]
      %v1610 = vld [vmem:[%s1606 + $0x18] sm:$0xff]
      %v1611 = vld [vmem:[%s1606 + $0x20] sm:$0xff]
      %v1613 = vsel %vm273, %v1607, 0
      %v1616 = vsel %vm273, %v1608, 0
      %v1619 = vsel %vm273, %v1609, 0
      %v1622 = vsel %vm273, %v1610, 0
      %v1625 = vsel %vm273, %v1611, 0
      %1627 = vmatprep.subr.mxu0 0.0
      %1628 = vmatpush1.msra.mxu0 0.0
      %1629 = vmatprep.subr.mxu0 0.0
      %1630 = vmatpush1.msra.mxu0 0.0
      %1631 = vmatprep.subr.mxu0 0.0
      %1632 = vmatpush1.msra.mxu0 0.0
      %1633 = vmatprep.subr.mxu0 0.0
      %1634 = vmatpush1.msra.mxu0 0.0
      %1635 = vmatprep.subr.mxu0 0.0
      %1636 = vmatpush1.msra.mxu0 0.0
      %1637 = vmatprep.subr.mxu0 0.0
      %1638 = vmatpush1.msra.mxu0 0.0
      %1639 = vmatprep.subr.mxu0 0.0
      %1640 = vmatpush1.msra.mxu0 0.0
      %1641 = vmatprep.subr.mxu0 0.0
      %1642 = vmatpush1.msra.mxu0 0.0
      %1643 = vmatprep.subr.mxu0 0.0
      %1644 = vmatpush1.msra.mxu0 0.0
      %1645 = vmatprep.subr.mxu0 0.0
      %1646 = vmatpush1.msra.mxu0 0.0
      %1647 = vmatprep.subr.mxu0 0.0
      %1648 = vmatpush1.msra.mxu0 0.0
      %1649 = vmatprep.subr.mxu0 0.0
      %1650 = vmatpush1.msra.mxu0 0.0
      %1651 = vmatprep.subr.mxu0 0.0
      %1652 = vmatpush1.msra.mxu0 0.0
      %1653 = vmatprep.subr.mxu0 0.0
      %1654 = vmatpush1.msra.mxu0 0.0
      %1655 = vmatprep.subr.mxu0 0.0
      %1656 = vmatpush1.msra.mxu0 0.0
      %1657 = vmatprep.subr.mxu0 %v280
      %1658 = vmatpush1.msra.mxu0 %v278
      %1659 = vmatprep.subr.mxu0 0.0
      %1660 = vmatpush2.msra.mxu0 0.0
      %1661 = vmatprep.subr.mxu0 0.0
      %1662 = vmatpush2.msra.mxu0 0.0
      %1663 = vmatprep.subr.mxu0 0.0
      %1664 = vmatpush2.msra.mxu0 0.0
      %1665 = vmatprep.subr.mxu0 0.0
      %1666 = vmatpush2.msra.mxu0 0.0
      %1667 = vmatprep.subr.mxu0 0.0
      %1668 = vmatpush2.msra.mxu0 0.0
      %1669 = vmatprep.subr.mxu0 0.0
      %1670 = vmatpush2.msra.mxu0 0.0
      %1671 = vmatprep.subr.mxu0 0.0
      %1672 = vmatpush2.msra.mxu0 0.0
      %1673 = vmatprep.subr.mxu0 0.0
      %1674 = vmatpush2.msra.mxu0 0.0
      %1675 = vmatprep.subr.mxu0 0.0
      %1676 = vmatpush2.msra.mxu0 0.0
      %1677 = vmatprep.subr.mxu0 0.0
      %1678 = vmatpush2.msra.mxu0 0.0
      %1679 = vmatprep.subr.mxu0 0.0
      %1680 = vmatpush2.msra.mxu0 0.0
      %1681 = vmatprep.subr.mxu0 0.0
      %1682 = vmatpush2.msra.mxu0 0.0
      %1683 = vmatprep.subr.mxu0 0.0
      %1684 = vmatpush2.msra.mxu0 0.0
      %1685 = vmatprep.subr.mxu0 0.0
      %1686 = vmatpush2.msra.mxu0 0.0
      %1687 = vmatprep.subr.mxu0 0.0
      %1688 = vmatpush2.msra.mxu0 0.0
      %1689 = vmatprep.subr.mxu0 0.0
      %1690 = vmatpush2.msra.mxu0 0.0
      %1691 = vmatprep.mubr.f32.mxu0 0.0
      %1692 = vmatmul.mubr.f32.gmra.mxu0 %v1613
      %v1693 = vpop.f32.mrf.mxu0
      %v1694 = vadd.f32 0.0, %v1693
      %v1695 = vpop.f32.mrf.mxu0
      %v1696 = vadd.f32 0.0, %v1695
      %1697 = vmatprep.mubr.f32.mxu0 0.0
      %1698 = vmatmul.mubr.f32.gmra.mxu0 %v1616
      %v1699 = vpop.f32.mrf.mxu0
      %v1700 = vadd.f32 0.0, %v1699
      %v1701 = vpop.f32.mrf.mxu0
      %v1702 = vadd.f32 0.0, %v1701
      %1703 = vmatprep.mubr.f32.mxu0 0.0
      %1704 = vmatmul.mubr.f32.gmra.mxu0 %v1619
      %v1705 = vpop.f32.mrf.mxu0
      %v1706 = vadd.f32 0.0, %v1705
      %v1707 = vpop.f32.mrf.mxu0
      %v1708 = vadd.f32 0.0, %v1707
      %1709 = vmatprep.mubr.f32.mxu0 0.0
      %1710 = vmatmul.mubr.f32.gmra.mxu0 %v1622
      %v1711 = vpop.f32.mrf.mxu0
      %v1712 = vadd.f32 0.0, %v1711
      %v1713 = vpop.f32.mrf.mxu0
      %v1714 = vadd.f32 0.0, %v1713
      %1715 = vmatprep.mubr.f32.mxu0 0.0
      %1716 = vmatmul.mubr.f32.gmra.mxu0 %v1625
      %v1717 = vpop.f32.mrf.mxu0
      %v1718 = vadd.f32 0.0, %v1717
      %v1719 = vpop.f32.mrf.mxu0
      %v1720 = vadd.f32 0.0, %v1719
      %1721 = vdwg.mxu0
      %1722 = vmatprep.subr.mxu0 0.0
      %1723 = vmatpush1.msra.mxu0 0.0
      %1724 = vmatprep.subr.mxu0 0.0
      %1725 = vmatpush1.msra.mxu0 0.0
      %1726 = vmatprep.subr.mxu0 0.0
      %1727 = vmatpush1.msra.mxu0 0.0
      %1728 = vmatprep.subr.mxu0 0.0
      %1729 = vmatpush1.msra.mxu0 0.0
      %1730 = vmatprep.subr.mxu0 0.0
      %1731 = vmatpush1.msra.mxu0 0.0
      %1732 = vmatprep.subr.mxu0 0.0
      %1733 = vmatpush1.msra.mxu0 0.0
      %1734 = vmatprep.subr.mxu0 0.0
      %1735 = vmatpush1.msra.mxu0 0.0
      %1736 = vmatprep.subr.mxu0 0.0
      %1737 = vmatpush1.msra.mxu0 0.0
      %1738 = vmatprep.subr.mxu0 0.0
      %1739 = vmatpush1.msra.mxu0 0.0
      %1740 = vmatprep.subr.mxu0 0.0
      %1741 = vmatpush1.msra.mxu0 0.0
      %1742 = vmatprep.subr.mxu0 0.0
      %1743 = vmatpush1.msra.mxu0 0.0
      %1744 = vmatprep.subr.mxu0 0.0
      %1745 = vmatpush1.msra.mxu0 0.0
      %1746 = vmatprep.subr.mxu0 0.0
      %1747 = vmatpush1.msra.mxu0 0.0
      %1748 = vmatprep.subr.mxu0 0.0
      %1749 = vmatpush1.msra.mxu0 0.0
      %1750 = vmatprep.subr.mxu0 0.0
      %1751 = vmatpush1.msra.mxu0 0.0
      %1752 = vmatprep.subr.mxu0 %v284
      %1753 = vmatpush1.msra.mxu0 %v282
      %1754 = vmatprep.subr.mxu0 0.0
      %1755 = vmatpush2.msra.mxu0 0.0
      %1756 = vmatprep.subr.mxu0 0.0
      %1757 = vmatpush2.msra.mxu0 0.0
      %1758 = vmatprep.subr.mxu0 0.0
      %1759 = vmatpush2.msra.mxu0 0.0
      %1760 = vmatprep.subr.mxu0 0.0
      %1761 = vmatpush2.msra.mxu0 0.0
      %1762 = vmatprep.subr.mxu0 0.0
      %1763 = vmatpush2.msra.mxu0 0.0
      %1764 = vmatprep.subr.mxu0 0.0
      %1765 = vmatpush2.msra.mxu0 0.0
      %1766 = vmatprep.subr.mxu0 0.0
      %1767 = vmatpush2.msra.mxu0 0.0
      %1768 = vmatprep.subr.mxu0 0.0
      %1769 = vmatpush2.msra.mxu0 0.0
      %1770 = vmatprep.subr.mxu0 0.0
      %1771 = vmatpush2.msra.mxu0 0.0
      %1772 = vmatprep.subr.mxu0 0.0
      %1773 = vmatpush2.msra.mxu0 0.0
      %1774 = vmatprep.subr.mxu0 0.0
      %1775 = vmatpush2.msra.mxu0 0.0
      %1776 = vmatprep.subr.mxu0 0.0
      %1777 = vmatpush2.msra.mxu0 0.0
      %1778 = vmatprep.subr.mxu0 0.0
      %1779 = vmatpush2.msra.mxu0 0.0
      %1780 = vmatprep.subr.mxu0 0.0
      %1781 = vmatpush2.msra.mxu0 0.0
      %1782 = vmatprep.subr.mxu0 0.0
      %1783 = vmatpush2.msra.mxu0 0.0
      %1784 = vmatprep.subr.mxu0 0.0
      %1785 = vmatpush2.msra.mxu0 0.0
      %1786 = vmatprep.mubr.f32.mxu0 0.0
      %1787 = vmatmul.mubr.f32.gmra.mxu0 %v1613
      %v1788 = vpop.f32.mrf.mxu0
      %v1789 = vadd.f32 0.0, %v1788
      %v1790 = vpop.f32.mrf.mxu0
      %v1791 = vadd.f32 0.0, %v1790
      %1792 = vmatprep.mubr.f32.mxu0 0.0
      %1793 = vmatmul.mubr.f32.gmra.mxu0 %v1616
      %v1794 = vpop.f32.mrf.mxu0
      %v1795 = vadd.f32 0.0, %v1794
      %v1796 = vpop.f32.mrf.mxu0
      %v1797 = vadd.f32 0.0, %v1796
      %1798 = vmatprep.mubr.f32.mxu0 0.0
      %1799 = vmatmul.mubr.f32.gmra.mxu0 %v1619
      %v1800 = vpop.f32.mrf.mxu0
      %v1801 = vadd.f32 0.0, %v1800
      %v1802 = vpop.f32.mrf.mxu0
      %v1803 = vadd.f32 0.0, %v1802
      %1804 = vmatprep.mubr.f32.mxu0 0.0
      %1805 = vmatmul.mubr.f32.gmra.mxu0 %v1622
      %v1806 = vpop.f32.mrf.mxu0
      %v1807 = vadd.f32 0.0, %v1806
      %v1808 = vpop.f32.mrf.mxu0
      %v1809 = vadd.f32 0.0, %v1808
      %1810 = vmatprep.mubr.f32.mxu0 0.0
      %1811 = vmatmul.mubr.f32.gmra.mxu0 %v1625
      %v1812 = vpop.f32.mrf.mxu0
      %v1813 = vadd.f32 0.0, %v1812
      %v1814 = vpop.f32.mrf.mxu0
      %v1815 = vadd.f32 0.0, %v1814
      %1816 = vdwg.mxu0
      %1817 = vst [vmem:[#allocation2] sm:$0xff] %v1694
      %1818 = vst [vmem:[#allocation2 + $0x8] sm:$0xff] %v1696
      %1819 = vst [vmem:[#allocation2 + $0x10] sm:$0xff] %v1789
      %1820 = vst.msk [vmem:[#allocation2 + $0x18] sm:$0xff] %vm679, %v1791
      %1821 = vst [vmem:[#allocation2 + $0x20] sm:$0xff] %v1700
      %1822 = vst [vmem:[#allocation2 + $0x28] sm:$0xff] %v1702
      %1823 = vst [vmem:[#allocation2 + $0x30] sm:$0xff] %v1795
      %1824 = vst.msk [vmem:[#allocation2 + $0x38] sm:$0xff] %vm679, %v1797
      %1825 = vst [vmem:[#allocation2 + $0x40] sm:$0xff] %v1706
      %1826 = vst [vmem:[#allocation2 + $0x48] sm:$0xff] %v1708
      %1827 = vst [vmem:[#allocation2 + $0x50] sm:$0xff] %v1801
      %1828 = vst.msk [vmem:[#allocation2 + $0x58] sm:$0xff] %vm679, %v1803
      %1829 = vst [vmem:[#allocation2 + $0x60] sm:$0xff] %v1712
      %1830 = vst [vmem:[#allocation2 + $0x68] sm:$0xff] %v1714
      %1831 = vst [vmem:[#allocation2 + $0x70] sm:$0xff] %v1807
      %1832 = vst.msk [vmem:[#allocation2 + $0x78] sm:$0xff] %vm679, %v1809
      %1833 = vst [vmem:[#allocation2 + $0x80] sm:$0xff] %v1718
      %1834 = vst [vmem:[#allocation2 + $0x88] sm:$0xff] %v1720
      %1835 = vst [vmem:[#allocation2 + $0x90] sm:$0xff] %v1813
      %1836 = vst.msk [vmem:[#allocation2 + $0x98] sm:$0xff] %vm679, %v1815
      %v1837 = vld [vmem:[%s257] sm:$0x1f]
      %v1838 = vld [vmem:[%s257 + $0x8] sm:$0x1f]
      %v1839 = vld [vmem:[%s257 + $0x10] sm:$0x1f]
      %v1840 = vld [vmem:[#allocation2] sm:$0x1f]
      %v1841 = vld [vmem:[#allocation2 + $0x8] sm:$0x1f]
      %v1842 = vld [vmem:[#allocation2 + $0x10] sm:$0x1f]
      %v1843 = vadd.f32 %v1837, %v1840
      %v1844 = vadd.f32 %v1838, %v1841
      %v1845 = vadd.f32 %v1839, %v1842
      %1846 = vst [vmem:[%s257] sm:$0x1f] %v1843
      %1847 = vst [vmem:[%s257 + $0x8] sm:$0x1f] %v1844
      %1848 = vst.msk [vmem:[%s257 + $0x10] sm:$0x1f] %vm464, %v1845
      %v1849 = vld [vmem:[%s257] sm:$0x1f]
      %v1850 = vld [vmem:[%s257 + $0x8] sm:$0x1f]
      %v1851 = vld [vmem:[%s257 + $0x10] sm:$0x1f]
      %v1852 = vld [vmem:[#allocation2] sm:$0xe0]
      %v1853 = vld [vmem:[#allocation2 + $0x8] sm:$0xe0]
      %v1854 = vld [vmem:[#allocation2 + $0x10] sm:$0xe0]
      %v1855 = vld [vmem:[#allocation2 + $0x20] sm:$0x3]
      %v1856 = vld [vmem:[#allocation2 + $0x28] sm:$0x3]
      %v1857 = vld [vmem:[#allocation2 + $0x30] sm:$0x3]
      %v1864 = vrot.slane %v1852, 5
      %v1865 = vrot.slane %v1855, 5
      %v1866 = vsel %vm748, %v1864, %v1865
      %v1867 = vrot.slane %v1853, 5
      %v1868 = vrot.slane %v1856, 5
      %v1869 = vsel %vm748, %v1867, %v1868
      %v1870 = vrot.slane %v1854, 5
      %v1871 = vrot.slane %v1857, 5
      %v1872 = vsel %vm748, %v1870, %v1871
      %1873 = vrot.lane.b32.xlu0 %v1866, 125
      %v1874 = vpop.permute.xlu0 %1873
      %1875 = vrot.lane.b32.xlu0 %v1869, 125
      %v1876 = vpop.permute.xlu0 %1875
      %1877 = vrot.lane.b32.xlu0 %v1872, 125
      %v1878 = vpop.permute.xlu0 %1877
      %vm1879 = vcmask 1022976
      %v1880 = vsel %vm1879, %v1874, %v1876
      %v1881 = vsel %vm1879, %v1876, %v1878
      %v1885 = vadd.f32 %v1849, %v1880
      %v1886 = vadd.f32 %v1850, %v1881
      %v1887 = vadd.f32 %v1851, %v1878
      %1888 = vst [vmem:[%s257] sm:$0x1f] %v1885
      %1889 = vst [vmem:[%s257 + $0x8] sm:$0x1f] %v1886
      %1890 = vst.msk [vmem:[%s257 + $0x10] sm:$0x1f] %vm464, %v1887
      %v1891 = vld [vmem:[%s257] sm:$0x1f]
      %v1892 = vld [vmem:[%s257 + $0x8] sm:$0x1f]
      %v1893 = vld [vmem:[%s257 + $0x10] sm:$0x1f]
      %v1894 = vld [vmem:[#allocation2 + $0x20] sm:$0x7c]
      %v1895 = vld [vmem:[#allocation2 + $0x28] sm:$0x7c]
      %v1896 = vld [vmem:[#allocation2 + $0x30] sm:$0x7c]
      %v1900 = vrot.slane %v1894, 2
      %v1901 = vrot.slane %v1895, 2
      %v1902 = vrot.slane %v1896, 2
      %1903 = vrot.lane.b32.xlu0 %v1900, 122
      %v1904 = vpop.permute.xlu0 %1903
      %1905 = vrot.lane.b32.xlu0 %v1901, 122
      %v1906 = vpop.permute.xlu0 %1905
      %1907 = vrot.lane.b32.xlu0 %v1902, 122
      %v1908 = vpop.permute.xlu0 %1907
      %vm1909 = vcmask 998400
      %v1910 = vsel %vm1909, %v1904, %v1906
      %v1911 = vsel %vm1909, %v1906, %v1908
      %v1915 = vadd.f32 %v1891, %v1910
      %v1916 = vadd.f32 %v1892, %v1911
      %v1917 = vadd.f32 %v1893, %v1908
      %1918 = vst [vmem:[%s257] sm:$0x1f] %v1915
      %1919 = vst [vmem:[%s257 + $0x8] sm:$0x1f] %v1916
      %1920 = vst.msk [vmem:[%s257 + $0x10] sm:$0x1f] %vm464, %v1917
      %v1921 = vld [vmem:[%s257] sm:$0x1f]
      %v1922 = vld [vmem:[%s257 + $0x8] sm:$0x1f]
      %v1923 = vld [vmem:[%s257 + $0x10] sm:$0x1f]
      %v1924 = vld [vmem:[#allocation2 + $0x20] sm:$0x80]
      %v1925 = vld [vmem:[#allocation2 + $0x28] sm:$0x80]
      %v1926 = vld [vmem:[#allocation2 + $0x30] sm:$0x80]
      %v1927 = vld [vmem:[#allocation2 + $0x38] sm:$0x80]
      %v1928 = vld [vmem:[#allocation2 + $0x40] sm:$0xf]
      %v1929 = vld [vmem:[#allocation2 + $0x48] sm:$0xf]
      %v1930 = vld [vmem:[#allocation2 + $0x50] sm:$0xf]
      %v1931 = vld [vmem:[#allocation2 + $0x58] sm:$0xf]
      %v1940 = vrot.slane %v1924, 7
      %v1941 = vrot.slane %v1928, 7
      %v1942 = vsel %vm837, %v1940, %v1941
      %v1943 = vrot.slane %v1925, 7
      %v1944 = vrot.slane %v1929, 7
      %v1945 = vsel %vm837, %v1943, %v1944
      %v1946 = vrot.slane %v1926, 7
      %v1947 = vrot.slane %v1930, 7
      %v1948 = vsel %vm837, %v1946, %v1947
      %v1949 = vrot.slane %v1927, 7
      %v1950 = vrot.slane %v1931, 7
      %v1951 = vsel %vm837, %v1949, %v1950
      %1952 = vrot.lane.b32.xlu0 %v1942, 62
      %v1953 = vpop.permute.xlu0 %1952
      %1954 = vrot.lane.b32.xlu0 %v1945, 62
      %v1955 = vpop.permute.xlu0 %1954
      %1956 = vrot.lane.b32.xlu0 %v1948, 62
      %v1957 = vpop.permute.xlu0 %1956
      %1958 = vrot.lane.b32.xlu0 %v1951, 62
      %v1959 = vpop.permute.xlu0 %1958
      %vm1960 = vcmask 506880
      %v1961 = vsel %vm1960, %v1953, %v1955
      %v1962 = vsel %vm1960, %v1955, %v1957
      %v1963 = vsel %vm1960, %v1957, %v1959
      %v1967 = vadd.f32 %v1921, %v1961
      %v1968 = vadd.f32 %v1922, %v1962
      %v1969 = vadd.f32 %v1923, %v1963
      %1970 = vst [vmem:[%s257] sm:$0x1f] %v1967
      %1971 = vst [vmem:[%s257 + $0x8] sm:$0x1f] %v1968
      %1972 = vst.msk [vmem:[%s257 + $0x10] sm:$0x1f] %vm464, %v1969
      %v1973 = vld [vmem:[%s257] sm:$0x1f]
      %v1974 = vld [vmem:[%s257 + $0x8] sm:$0x1f]
      %v1975 = vld [vmem:[%s257 + $0x10] sm:$0x1f]
      %v1976 = vld [vmem:[#allocation2 + $0x40] sm:$0xf0]
      %v1977 = vld [vmem:[#allocation2 + $0x48] sm:$0xf0]
      %v1978 = vld [vmem:[#allocation2 + $0x50] sm:$0xf0]
      %v1979 = vld [vmem:[#allocation2 + $0x58] sm:$0xf0]
      %v1980 = vld [vmem:[#allocation2 + $0x60] sm:$0x1]
      %v1981 = vld [vmem:[#allocation2 + $0x68] sm:$0x1]
      %v1982 = vld [vmem:[#allocation2 + $0x70] sm:$0x1]
      %v1983 = vld [vmem:[#allocation2 + $0x78] sm:$0x1]
      %v1992 = vrot.slane %v1976, 4
      %v1993 = vrot.slane %v1980, 4
      %v1994 = vsel %vm277, %v1992, %v1993
      %v1995 = vrot.slane %v1977, 4
      %v1996 = vrot.slane %v1981, 4
      %v1997 = vsel %vm277, %v1995, %v1996
      %v1998 = vrot.slane %v1978, 4
      %v1999 = vrot.slane %v1982, 4
      %v2000 = vsel %vm277, %v1998, %v1999
      %v2001 = vrot.slane %v1979, 4
      %v2002 = vrot.slane %v1983, 4
      %v2003 = vsel %vm277, %v2001, %v2002
      %2004 = vrot.lane.b32.xlu0 %v1994, 56
      %v2005 = vpop.permute.xlu0 %2004
      %2006 = vrot.lane.b32.xlu0 %v1997, 56
      %v2007 = vpop.permute.xlu0 %2006
      %2008 = vrot.lane.b32.xlu0 %v2000, 56
      %v2009 = vpop.permute.xlu0 %2008
      %2010 = vrot.lane.b32.xlu0 %v2003, 56
      %v2011 = vpop.permute.xlu0 %2010
      %vm2012 = vcmask 457728
      %v2013 = vsel %vm2012, %v2005, %v2007
      %v2014 = vsel %vm2012, %v2007, %v2009
      %v2015 = vsel %vm2012, %v2009, %v2011
      %v2019 = vadd.f32 %v1973, %v2013
      %v2020 = vadd.f32 %v1974, %v2014
      %v2021 = vadd.f32 %v1975, %v2015
      %2022 = vst [vmem:[%s257] sm:$0x1f] %v2019
      %2023 = vst [vmem:[%s257 + $0x8] sm:$0x1f] %v2020
      %2024 = vst.msk [vmem:[%s257 + $0x10] sm:$0x1f] %vm464, %v2021
      %v2025 = vld [vmem:[%s257] sm:$0x1f]
      %v2026 = vld [vmem:[%s257 + $0x8] sm:$0x1f]
      %v2027 = vld [vmem:[%s257 + $0x10] sm:$0x1f]
      %v2028 = vld [vmem:[#allocation2 + $0x68] sm:$0x3e]
      %v2029 = vld [vmem:[#allocation2 + $0x70] sm:$0x3e]
      %v2030 = vld [vmem:[#allocation2 + $0x78] sm:$0x3e]
      %v2034 = vrot.slane %v2028, 1
      %v2035 = vrot.slane %v2029, 1
      %v2036 = vrot.slane %v2030, 1
      %2037 = vrot.lane.b32.xlu0 %v2034, 124
      %v2038 = vpop.permute.xlu0 %2037
      %2039 = vrot.lane.b32.xlu0 %v2035, 124
      %v2040 = vpop.permute.xlu0 %2039
      %2041 = vrot.lane.b32.xlu0 %v2036, 124
      %v2042 = vpop.permute.xlu0 %2041
      %vm2043 = vcmask 1014784
      %v2044 = vsel %vm2043, %v2038, %v2040
      %v2045 = vsel %vm2043, %v2040, %v2042
      %v2049 = vadd.f32 %v2025, %v2044
      %v2050 = vadd.f32 %v2026, %v2045
      %v2051 = vadd.f32 %v2027, %v2042
      %2052 = vst [vmem:[%s257] sm:$0x1f] %v2049
      %2053 = vst [vmem:[%s257 + $0x8] sm:$0x1f] %v2050
      %2054 = vst.msk [vmem:[%s257 + $0x10] sm:$0x1f] %vm464, %v2051
      %v2055 = vld [vmem:[%s257] sm:$0x1f]
      %v2056 = vld [vmem:[%s257 + $0x8] sm:$0x1f]
      %v2057 = vld [vmem:[%s257 + $0x10] sm:$0x1f]
      %v2058 = vld [vmem:[#allocation2 + $0x68] sm:$0xc0]
      %v2059 = vld [vmem:[#allocation2 + $0x70] sm:$0xc0]
      %v2060 = vld [vmem:[#allocation2 + $0x78] sm:$0xc0]
      %v2061 = vld [vmem:[#allocation2 + $0x88] sm:$0x7]
      %v2062 = vld [vmem:[#allocation2 + $0x90] sm:$0x7]
      %v2063 = vld [vmem:[#allocation2 + $0x98] sm:$0x7]
      %v2070 = vrot.slane %v2058, 6
      %v2071 = vrot.slane %v2061, 6
      %v2072 = vsel %vm978, %v2070, %v2071
      %v2073 = vrot.slane %v2059, 6
      %v2074 = vrot.slane %v2062, 6
      %v2075 = vsel %vm978, %v2073, %v2074
      %v2076 = vrot.slane %v2060, 6
      %v2077 = vrot.slane %v2063, 6
      %v2078 = vsel %vm978, %v2076, %v2077
      %2079 = vrot.lane.b32.xlu0 %v2072, 121
      %v2080 = vpop.permute.xlu0 %2079
      %2081 = vrot.lane.b32.xlu0 %v2075, 121
      %v2082 = vpop.permute.xlu0 %2081
      %2083 = vrot.lane.b32.xlu0 %v2078, 121
      %v2084 = vpop.permute.xlu0 %2083
      %vm2085 = vcmask 990208
      %v2086 = vsel %vm2085, %v2080, %v2082
      %v2087 = vsel %vm2085, %v2082, %v2084
      %v2091 = vadd.f32 %v2055, %v2086
      %v2092 = vadd.f32 %v2056, %v2087
      %v2093 = vadd.f32 %v2057, %v2084
      %2094 = vst [vmem:[%s257] sm:$0x1f] %v2091
      %2095 = vst [vmem:[%s257 + $0x8] sm:$0x1f] %v2092
      %2096 = vst.msk [vmem:[%s257 + $0x10] sm:$0x1f] %vm464, %v2093
      %v2097 = vld [vmem:[%s257] sm:$0x1f]
      %v2098 = vld [vmem:[%s257 + $0x8] sm:$0x1f]
      %v2099 = vld [vmem:[%s257 + $0x10] sm:$0x1f]
      %v2100 = vld [vmem:[#allocation2 + $0x88] sm:$0xf8]
      %v2101 = vld [vmem:[#allocation2 + $0x90] sm:$0xf8]
      %v2102 = vld [vmem:[#allocation2 + $0x98] sm:$0xf8]
      %v2106 = vrot.slane %v2100, 3
      %v2107 = vrot.slane %v2101, 3
      %v2108 = vrot.slane %v2102, 3
      %2109 = vrot.lane.b32.xlu0 %v2106, 118
      %v2110 = vpop.permute.xlu0 %2109
      %2111 = vrot.lane.b32.xlu0 %v2107, 118
      %v2112 = vpop.permute.xlu0 %2111
      %2113 = vrot.lane.b32.xlu0 %v2108, 118
      %v2114 = vpop.permute.xlu0 %2113
      %vm2115 = vcmask 965632
      %v2116 = vsel %vm2115, %v2110, %v2112
      %v2117 = vsel %vm2115, %v2112, %v2114
      %v2121 = vadd.f32 %v2097, %v2116
      %v2122 = vadd.f32 %v2098, %v2117
      %v2123 = vadd.f32 %v2099, %v2114
      %2124 = vst [vmem:[%s257] sm:$0x1f] %v2121
      %2125 = vst [vmem:[%s257 + $0x8] sm:$0x1f] %v2122
      %2126 = vst.msk [vmem:[%s257 + $0x10] sm:$0x1f] %vm464, %v2123
      // Predicated region
      $region41: #{tpu_custom_call.1} parent=35 // pred_check
        %p2127 = pneg %p258
      $region42: #{tpu_custom_call.1} parent=35 // pred_check_branch
        %2129 = sbr.rel (%p2127) target = $region44
      $region43: #{tpu_custom_call.1} parent=35 // pred_region
        %v2130 = vld [vmem:[%s257] sm:$0x1f]
        %v2131 = vld [vmem:[%s257 + $0x8] sm:$0x1f]
        %v2132 = vld [vmem:[%s257 + $0x10] sm:$0x1f]
        %v2133 = vld [vmem:[%s3] sm:$0x1f]
        %2135 = vset.pattern.permute.xlu0 0
        %2136 = vperm.xlu0 %2135, %v2133
        %v2137 = vpop.permute.xlu0 %2136
        %v2139 = vadd.f32 %v2130, %v2137
        %v2140 = vadd.f32 %v2131, %v2137
        %v2141 = vadd.f32 %v2132, %v2137
        %2142 = vst [vmem:[%s257] sm:$0x1f] %v2139
        %2143 = vst [vmem:[%s257 + $0x8] sm:$0x1f] %v2140
        %2144 = vst.msk [vmem:[%s257 + $0x10] sm:$0x1f] %vm464, %v2141
      $region44: #{tpu_custom_call.1} parent=35 // pred_fallthru
        _
      %p2145 = scmp.lt.s32.totalorder %s19, 1
      %s2146 = scalar_select %p2145, %s19, 1
      %s2147 = smul.addr %s2146, 3
      %s2148 = smul.addr %s2147, 8
      %s2149 = scalar_lea.vmem %s4, %s2148
      // Predicated region
      $region45: #{tpu_custom_call.1} parent=35 // pred_check
        %p2150 = pneg %p146
      $region46: #{tpu_custom_call.1} parent=35 // pred_check_branch
        %2152 = sbr.rel (%p2150) target = $region48
      $region47: #{tpu_custom_call.1} parent=35 // pred_region
        _
      $region48: #{tpu_custom_call.1} parent=35 // pred_fallthru
        _
    $region36: #{tpu_custom_call.1} parent=5 // pred_fallthru
      _
    %p2153 = scmp.le.s32.totalorder 2, %s10
    // Predicated region
    $region49: #{tpu_custom_call.1} parent=5 // pred_check
      %p2154 = pneg %p2153
    $region50: #{tpu_custom_call.1} parent=5 // pred_check_branch
      %2156 = sbr.rel (%p2154) target = $region52
    $region51: #{tpu_custom_call.1} parent=5 // pred_region
      %s2157 = ssub.s32 %s10, 2
      // Predicated region
      $region53: #{tpu_custom_call.1} parent=51 // pred_check
        %p2158 = pneg %p152
      $region54: #{tpu_custom_call.1} parent=51 // pred_check_branch
        %2160 = sbr.rel (%p2158) target = $region56
      $region55: #{tpu_custom_call.1} parent=51 // pred_region
        %p2161 = scmp.lt.s32.totalorder %s21, 1
        %s2162 = scalar_select %p2161, %s21, 1
        %s2163 = smul.addr %s2162, 3
        %s2164 = smul.addr %s2163, 8
        %s2165 = scalar_lea.vmem %s4, %s2164
      $region56: #{tpu_custom_call.1} parent=51 // pred_fallthru
        _
    $region52: #{tpu_custom_call.1} parent=5 // pred_fallthru
      _
  $region6: #{tpu_custom_call.1} parent=0 // loop_footer
    %s14 = sadd.s32 1, %s10
  $region7: #{tpu_custom_call.1} parent=0 // loop_footer_branch
    %9 = sbr.rel target = $region3
  $region8: #{tpu_custom_call.1} parent=0 // loop_exit
    _

</llo_original>
